<compile_context>
chip_gen: v6e
topology: v6e:2x2x1
jax: 0.10.0
libtpu: 0.0.40
codegen_flags: <defaults>
</compile_context>

<pallas_src>
import functools

import jax
import jax.numpy as jnp
from jax import lax
from jax.experimental import pallas as pl
from jax.experimental.pallas import tpu as pltpu

NEG_SLOPE = 0.01   # torch.nn.LeakyReLU default
BN_EPS = 1e-5      # torch.nn.BatchNorm2d default
LANE = 128


def _round_up(x, m):
    return ((x + m - 1) // m) * m


# ----------------------------------------------------------------------------- kernel

def pool_conv_kernel(x_ref, w1_ref, s1_ref, b1_ref, w2_ref, s2_ref, b2_ref,
                     o_ref, pool_ref, pad2_ref):
    # x_ref   : (B, Hp, 2, Wp, 2*cin) f32 -- whole image, 2x2 pool phases folded into an
    #           H-split of 2 and a lane doubling; resident across the row-tile axis.
    # w*_ref  : (Kp, c_out) bf16 -- packed im2col weights, row = (ky*3+kx)*cin + c; the
    #           K-tail rows are zero so the zero tail of the im2col slab is inert.
    # s*/b*   : (1, c_out) f32 -- folded BatchNorm(eval) scale / bias.
    # o_ref   : (B, Ht, Wp, cout) f32 -- one output row tile (real channels only).
    # pool_ref: (B, Hp+4, Wp+2, cin) f32 -- pooled image, zero-padded 2 rows / 1 col.
    # pad2_ref: (B, Ht+2, Wp+2, mid) f32 -- conv2's zero-padded input for this row tile.
    b_blk, Ht, Wp, _ = o_ref.shape
    Hp = pool_ref.shape[1] - 4
    cin = pool_ref.shape[3]
    mid = pad2_ref.shape[3]
    r = pl.program_id(1)
    nr = pl.num_programs(1)
    R0 = r * Ht

    # ---- MaxPool2d(2) + zero border, once per batch block (row-tile axis is the inner,
    # "arbitrary" axis, so r == 0 always runs before the other row tiles of this block).
    @pl.when(r == 0)
    def _():
        x = x_ref[...]                                      # (B, Hp, 2, Wp, 2*cin)
        m = jnp.maximum(x[:, :, 0], x[:, :, 1])             # max over the two H phases
        pooled = jnp.maximum(m[..., :cin], m[..., cin:])    # max over the two W phases
        zrows = jnp.zeros((b_blk, 2, Wp + 2, cin), pool_ref.dtype)
        zcol = jnp.zeros((b_blk, Hp + 4, 1, cin), pool_ref.dtype)
        pool_ref[:, 0:2] = zrows                            # 2-row zero halo (top)
        pool_ref[:, Hp + 2:Hp + 4] = zrows                  # 2-row zero halo (bottom)
        pool_ref[:, :, 0:1, :] = zcol                       # 1-col zero pad (left)
        pool_ref[:, :, Wp + 1:Wp + 2, :] = zcol             # 1-col zero pad (right)
        pool_ref[:, 2:Hp + 2, 1:Wp + 1, :] = pooled

    def conv_bn_lrelu(pieces, w_ref, s_ref, b_ref, rows):
        # One fused im2col matmul on the MXU (bf16 operands, f32 accumulation),
        # then folded-BN affine + LeakyReLU on the VPU.
        kpad = w_ref.shape[0]
        cw = pieces[0].shape[-1]
        if kpad > 9 * cw:                                   # zero K tail (packed layout)
            pieces = pieces + [jnp.zeros(pieces[0].shape[:-1] + (kpad - 9 * cw,),
                                         pieces[0].dtype)]
        a = jnp.concatenate(pieces, axis=-1)                # (B, rows, Wp, kpad)
        a = a.reshape(b_blk * rows * Wp, kpad).astype(jnp.bfloat16)
        y = jnp.dot(a, w_ref[...], preferred_element_type=jnp.float32)
        y = y * s_ref[...] + b_ref[...]                     # folded BatchNorm (eval)
        y = jnp.maximum(y, NEG_SLOPE * y)                   # LeakyReLU as a single vmax
        return y.reshape(b_blk, rows, Wp, w_ref.shape[1])

    # ---- conv1 on the row tile + 1-row halo (conv1 output rows R0-1 .. R0+Ht) ----------
    # Per dy: one aligned ref read of the Ht+2 needed rows; dx shifts are value slices.
    p1 = []
    for dy in range(3):
        blk = pool_ref[:, pl.ds(R0 + dy, Ht + 2), :, :]     # (B, Ht+2, Wp+2, cin)
        for dx in range(3):
            p1.append(blk[:, :, dx:dx + Wp, :])
    h = conv_bn_lrelu(p1, w1_ref, s1_ref, b1_ref, Ht + 2)   # (B, Ht+2, Wp, mid) f32

    # ---- pad2: conv2's zero-padded input for this row tile -----------------------------
    zc = jnp.zeros((b_blk, Ht + 2, 1, mid), pad2_ref.dtype)
    pad2_ref[:, :, 0:1, :] = zc
    pad2_ref[:, :, Wp + 1:Wp + 2, :] = zc
    pad2_ref[:, :, 1:Wp + 1, :] = h

    zr = jnp.zeros((b_blk, 1, Wp + 2, mid), pad2_ref.dtype)

    @pl.when(r == 0)                 # conv1 "row -1" is conv2's zero padding
    def _():
        pad2_ref[:, 0:1, :, :] = zr

    @pl.when(r == nr - 1)            # conv1 "row Hp" is conv2's zero padding
    def _():
        pad2_ref[:, Ht + 1:Ht + 2, :, :] = zr

    # ---- conv2 on the row tile ----------------------------------------------------------
    p2 = []
    for dy in range(3):
        blk = pad2_ref[:, dy:dy + Ht, :, :]                 # (B, Ht, Wp+2, mid)
        for dx in range(3):
            p2.append(blk[:, :, dx:dx + Wp, :])
    out = conv_bn_lrelu(p2, w2_ref, s2_ref, b2_ref, Ht)     # (B, Ht, Wp, cout) f32
    o_ref[...] = out.astype(o_ref.dtype)


# ----------------------------------------------------------------------------- wrapper

def pool_conv_pallas(x_nchw, w1, s1, b1, w2, s2, b2, *, b_blk=1, row_tile=None):
    """x_nchw: (N, Cin, H, W) f32.  Folded/packed params from fold_params.
    Returns (N, cout, H//2, W//2) f32."""
    N, Cin, H, W = x_nchw.shape
    Hp, Wp = H // 2, W // 2
    x_nchw = x_nchw[:, :, :2 * Hp, :2 * Wp]          # MaxPool2d(2) floors odd H/W
    mid, cout = w1.shape[1], w2.shape[1]
    assert w1.shape[0] == _round_up(9 * Cin, LANE)
    assert w2.shape[0] == _round_up(9 * mid, LANE)
    assert N % b_blk == 0, "batch must be divisible by b_blk"

    if row_tile is None:                             # largest divisor of Hp that is <= 32
        row_tile = Hp
        for cand in range(min(Hp, 32), 0, -1):
            if Hp % cand == 0:
                row_tile = cand
                break
    Ht = row_tile
    assert Hp % Ht == 0, "pooled height must be divisible by the row tile"

    # Layout glue: one NCHW->NHWC transpose, then a FREE reshape (no dim reordering) that
    # exposes the 2x2 pool phases as an H-split of 2 and a lane doubling.
    # TODO(synk): the NCHW<->NHWC boundary transposes are extra HBM passes; fold them into
    # the kernel's load/store if the surrounding network keeps NCHW.
    x = jnp.transpose(x_nchw, (0, 2, 3, 1)).reshape(N, Hp, 2, Wp, 2 * Cin)

    # Crude physically-padded VMEM estimate -> explicit scoped-VMEM limit with headroom.
    def padded_bytes(shape, dtype):
        s = list(shape)
        s[-1] = _round_up(s[-1], 128)
        if len(s) >= 2:
            s[-2] = _round_up(s[-2], 8)
        n = 1
        for d in s:
            n *= d
        return n * jnp.dtype(dtype).itemsize

    est = (2 * padded_bytes((b_blk, Hp, 2, Wp, 2 * Cin), jnp.float32)
           + 2 * padded_bytes((b_blk, Ht, Wp, cout), jnp.float32)
           + 2 * sum(padded_bytes(a.shape, a.dtype) for a in (w1, s1, b1, w2, s2, b2))
           + padded_bytes((b_blk, Hp + 4, Wp + 2, Cin), jnp.float32)
           + padded_bytes((b_blk, Ht + 2, Wp + 2, mid), jnp.float32))
    vmem_limit = int(min(max(3 * est // 2 + (8 << 20), 16 << 20), 100 << 20))

    out = pl.pallas_call(
        pool_conv_kernel,
        out_shape=jax.ShapeDtypeStruct((N, Hp, Wp, cout), jnp.float32),
        grid_spec=pltpu.PrefetchScalarGridSpec(
            num_scalar_prefetch=0,
            grid=(N // b_blk, Hp // Ht),
            in_specs=[
                # whole image per batch block; block index constant over the row axis so
                # it is fetched once per batch block (no re-DMA across row tiles).
                pl.BlockSpec((b_blk, Hp, 2, Wp, 2 * Cin), lambda n, r: (n, 0, 0, 0, 0)),
                pl.BlockSpec(w1.shape, lambda n, r: (0, 0)),
                pl.BlockSpec(s1.shape, lambda n, r: (0, 0)),
                pl.BlockSpec(b1.shape, lambda n, r: (0, 0)),
                pl.BlockSpec(w2.shape, lambda n, r: (0, 0)),
                pl.BlockSpec(s2.shape, lambda n, r: (0, 0)),
                pl.BlockSpec(b2.shape, lambda n, r: (0, 0)),
            ],
            out_specs=pl.BlockSpec((b_blk, Ht, Wp, cout), lambda n, r: (n, r, 0, 0)),
            scratch_shapes=[
                pltpu.VMEM((b_blk, Hp + 4, Wp + 2, Cin), jnp.float32),   # pooled + zero pad
                pltpu.VMEM((b_blk, Ht + 2, Wp + 2, mid), jnp.float32),   # conv2 padded tile
            ],
        ),
        compiler_params=pltpu.CompilerParams(
            dimension_semantics=("parallel", "arbitrary"),   # batch axis megacore-parallel
            vmem_limit_bytes=vmem_limit,
        ),
    )(x, w1, s1, b1, w2, s2, b2)

    return jnp.transpose(out, (0, 3, 1, 2))          # back to NCHW


# ----------------------------------------------------------------------------- params

def init_single_conv_params(key, cin, cout):
    """Deterministic synthetic params for Conv2d(cin,cout,3,pad=1)+BatchNorm2d(cout)."""
    ks = jax.random.split(key, 6)
    w = jax.random.normal(ks[0], (cout, cin, 3, 3), jnp.float32) * 0.1   # OIHW (torch)
    b = jax.random.normal(ks[1], (cout,), jnp.float32) * 0.1
    gamma = 1.0 + 0.1 * jax.random.normal(ks[2], (cout,), jnp.float32)
    beta = 0.1 * jax.random.normal(ks[3], (cout,), jnp.float32)
    mean = 0.1 * jax.random.normal(ks[4], (cout,), jnp.float32)
    var = jax.random.uniform(ks[5], (cout,), jnp.float32, 0.5, 1.5)
    return dict(w=w, b=b, gamma=gamma, beta=beta, mean=mean, var=var)


def fold_params(p, lane=LANE):
    """Fold conv bias + eval-mode BatchNorm into per-channel (scale, bias), and lay the
    3x3 weight out as a packed-K im2col matrix (row = (ky*3+kx)*cin + c) in bf16.
    Only the K dimension is padded (to a lane multiple) and the padded rows are ZERO, so
    the zero tail of the in-kernel im2col slab contributes nothing.  Output channels are
    kept at their real size (no padded output channels)."""
    # TODO(synk): BatchNorm2d reproduced in inference mode (running stats); training-mode
    # batch-statistics normalization is not computed.
    cout, cin = p["w"].shape[0], p["w"].shape[1]
    kpad = _round_up(9 * cin, lane)
    scale = p["gamma"] / jnp.sqrt(p["var"] + BN_EPS)                     # (cout,)
    bias = p["beta"] + (p["b"] - p["mean"]) * scale                      # (cout,)
    w = jnp.transpose(p["w"], (2, 3, 1, 0)).reshape(9 * cin, cout)       # row=(ky*3+kx)*cin+c
    w = jnp.pad(w, ((0, kpad - 9 * cin), (0, 0)))                        # zero K-tail rows
    return (w.astype(jnp.bfloat16),
            scale[None, :].astype(jnp.float32),
            bias[None, :].astype(jnp.float32))


# ----------------------------------------------------------------------------- reference

def ref_single_conv(x, p):
    y = lax.conv_general_dilated(x, p["w"], window_strides=(1, 1),
                                 padding=((1, 1), (1, 1)),
                                 dimension_numbers=("NCHW", "OIHW", "NCHW"))
    y = y + p["b"][None, :, None, None]
    y = (y - p["mean"][None, :, None, None]) / jnp.sqrt(p["var"][None, :, None, None] + BN_EPS)
    y = y * p["gamma"][None, :, None, None] + p["beta"][None, :, None, None]
    return jnp.where(y >= 0, y, NEG_SLOPE * y)


def ref_pool_conv(x, p1, p2):
    xp = lax.reduce_window(x, -jnp.inf, lax.max, (1, 1, 2, 2), (1, 1, 2, 2), "VALID")
    return ref_single_conv(ref_single_conv(xp, p1), p2)


# ----------------------------------------------------------------------------- main

if __name__ == "__main__":
    N, Cin, Cout, H, W = 2, 4, 8, 16, 16

    key = jax.random.PRNGKey(0)
    kx, k1, k2 = jax.random.split(key, 3)
    x = jax.random.normal(kx, (N, Cin, H, W), jnp.float32)

    p1 = init_single_conv_params(k1, Cin, Cout)   # DoubleConv: mid_channels = out_channels
    p2 = init_single_conv_params(k2, Cout, Cout)
    w1, s1, b1 = fold_params(p1)
    w2, s2, b2 = fold_params(p2)

    # row_tile=4 -> grid (2, 2): exercises both the batch axis and the halo'd row tiling
    # (including the r==0 / r==last border zeroing on different grid steps).
    run = jax.jit(functools.partial(pool_conv_pallas, b_blk=1, row_tile=4))
    out = jax.block_until_ready(run(x, w1, s1, b1, w2, s2, b2))

    expected = jax.block_until_ready(ref_pool_conv(x, p1, p2))

    assert out.shape == (N, Cout, H // 2, W // 2), out.shape
    max_err = float(jnp.max(jnp.abs(out - expected)))
    # bf16 matmul operands with f32 accumulation: loosened tolerance vs. the f32 reference.
    assert jnp.allclose(out, expected, atol=3e-2, rtol=3e-2), max_err
    print("KERNEL_OK")
</pallas_src>

<mosaic_0001>
module attributes {stable_mosaic.version = 11 : i64} {
  func.func @pool_conv_kernel(%arg0: i32, %arg1: i32, %arg2: memref<1x8x2x8x8xf32, #tpu.memory_space<vmem>>, %arg3: memref<128x8xbf16, #tpu.memory_space<vmem>>, %arg4: memref<1x8xf32, #tpu.memory_space<vmem>>, %arg5: memref<1x8xf32, #tpu.memory_space<vmem>>, %arg6: memref<128x8xbf16, #tpu.memory_space<vmem>>, %arg7: memref<1x8xf32, #tpu.memory_space<vmem>>, %arg8: memref<1x8xf32, #tpu.memory_space<vmem>>, %arg9: memref<1x4x8x8xf32, #tpu.memory_space<vmem>>, %arg10: memref<1x12x10x4xf32, #tpu.memory_space<vmem>>, %arg11: memref<1x6x10x8xf32, #tpu.memory_space<vmem>>) attributes {dimension_semantics = [#tpu.dimension_semantics<parallel>, #tpu.dimension_semantics<arbitrary>], iteration_bounds = array<i64: 2, 2>, scalar_prefetch = 0 : i64, scratch_operands = 2 : i64, tpu.core_type = #tpu.core_type<tc>, window_params = [{transform_indices = @transform_0, window_bounds = array<i64: 1, 8, 2, 8, 8>}, {pipeline_mode = #tpu.pipeline_mode<synchronous>, transform_indices = @transform_1, window_bounds = array<i64: 128, 8>}, {pipeline_mode = #tpu.pipeline_mode<synchronous>, transform_indices = @transform_2, window_bounds = array<i64: 1, 8>}, {pipeline_mode = #tpu.pipeline_mode<synchronous>, transform_indices = @transform_3, window_bounds = array<i64: 1, 8>}, {pipeline_mode = #tpu.pipeline_mode<synchronous>, transform_indices = @transform_4, window_bounds = array<i64: 128, 8>}, {pipeline_mode = #tpu.pipeline_mode<synchronous>, transform_indices = @transform_5, window_bounds = array<i64: 1, 8>}, {pipeline_mode = #tpu.pipeline_mode<synchronous>, transform_indices = @transform_6, window_bounds = array<i64: 1, 8>}, {transform_indices = @transform_7, window_bounds = array<i64: 1, 4, 8, 8>}]} {
    %c4_i32 = arith.constant 4 : i32
    %0 = arith.muli %arg1, %c4_i32 : i32
    %c0_i32 = arith.constant 0 : i32
    %1 = arith.cmpi eq, %arg1, %c0_i32 : i32
    %2 = arith.extui %1 : i1 to i32
    %c0_i32_0 = arith.constant 0 : i32
    %3 = arith.cmpi ne, %2, %c0_i32_0 : i32
    scf.if %3 {
      %c0_58 = arith.constant 0 : index
      %c0_59 = arith.constant 0 : index
      %c0_60 = arith.constant 0 : index
      %c0_61 = arith.constant 0 : index
      %c0_62 = arith.constant 0 : index
      %78 = vector.load %arg2[%c0_58, %c0_59, %c0_60, %c0_61, %c0_62] : memref<1x8x2x8x8xf32, #tpu.memory_space<vmem>>, vector<1x8x2x8x8xf32>
      %79 = vector.extract_strided_slice %78 {offsets = [0, 0, 0, 0, 0], sizes = [1, 8, 1, 8, 8], strides = [1, 1, 1, 1, 1]} : vector<1x8x2x8x8xf32> to vector<1x8x1x8x8xf32>
      %80 = vector.shape_cast %79 : vector<1x8x1x8x8xf32> to vector<1x8x8x8xf32>
      %81 = vector.extract_strided_slice %78 {offsets = [0, 0, 1, 0, 0], sizes = [1, 8, 1, 8, 8], strides = [1, 1, 1, 1, 1]} : vector<1x8x2x8x8xf32> to vector<1x8x1x8x8xf32>
      %82 = vector.shape_cast %81 : vector<1x8x1x8x8xf32> to vector<1x8x8x8xf32>
      %83 = arith.maximumf %80, %82 : vector<1x8x8x8xf32>
      %84 = vector.extract_strided_slice %83 {offsets = [0, 0, 0, 0], sizes = [1, 8, 8, 4], strides = [1, 1, 1, 1]} : vector<1x8x8x8xf32> to vector<1x8x8x4xf32>
      %85 = vector.extract_strided_slice %83 {offsets = [0, 0, 0, 4], sizes = [1, 8, 8, 4], strides = [1, 1, 1, 1]} : vector<1x8x8x8xf32> to vector<1x8x8x4xf32>
      %86 = arith.maximumf %84, %85 : vector<1x8x8x4xf32>
      %cst_63 = arith.constant 0.000000e+00 : f32
      %87 = vector.broadcast %cst_63 : f32 to vector<1x2x10x4xf32>
      %cst_64 = arith.constant 0.000000e+00 : f32
      %88 = vector.broadcast %cst_64 : f32 to vector<1x12x1x4xf32>
      %c0_65 = arith.constant 0 : index
      %c0_66 = arith.constant 0 : index
      %c0_67 = arith.constant 0 : index
      %c0_68 = arith.constant 0 : index
      %89 = vector.load %arg10[%c0_65, %c0_66, %c0_67, %c0_68] : memref<1x12x10x4xf32, #tpu.memory_space<vmem>>, vector<1x2x10x4xf32>
      tpu.vector_store %arg10[%c0_65, %c0_66, %c0_67, %c0_68], %87 {strides = array<i32>} : memref<1x12x10x4xf32, #tpu.memory_space<vmem>>, vector<1x2x10x4xf32>,
      %c0_69 = arith.constant 0 : index
      %c10 = arith.constant 10 : index
      %c0_70 = arith.constant 0 : index
      %c0_71 = arith.constant 0 : index
      %90 = vector.load %arg10[%c0_69, %c10, %c0_70, %c0_71] : memref<1x12x10x4xf32, #tpu.memory_space<vmem>>, vector<1x2x10x4xf32>
      tpu.vector_store %arg10[%c0_69, %c10, %c0_70, %c0_71], %87 {strides = array<i32>} : memref<1x12x10x4xf32, #tpu.memory_space<vmem>>, vector<1x2x10x4xf32>,
      %c0_72 = arith.constant 0 : index
      %c0_73 = arith.constant 0 : index
      %c0_74 = arith.constant 0 : index
      %c0_75 = arith.constant 0 : index
      %91 = vector.load %arg10[%c0_72, %c0_73, %c0_74, %c0_75] : memref<1x12x10x4xf32, #tpu.memory_space<vmem>>, vector<1x12x1x4xf32>
      tpu.vector_store %arg10[%c0_72, %c0_73, %c0_74, %c0_75], %88 {strides = array<i32>} : memref<1x12x10x4xf32, #tpu.memory_space<vmem>>, vector<1x12x1x4xf32>,
      %c0_76 = arith.constant 0 : index
      %c0_77 = arith.constant 0 : index
      %c9_78 = arith.constant 9 : index
      %c0_79 = arith.constant 0 : index
      %92 = vector.load %arg10[%c0_76, %c0_77, %c9_78, %c0_79] : memref<1x12x10x4xf32, #tpu.memory_space<vmem>>, vector<1x12x1x4xf32>
      tpu.vector_store %arg10[%c0_76, %c0_77, %c9_78, %c0_79], %88 {strides = array<i32>} : memref<1x12x10x4xf32, #tpu.memory_space<vmem>>, vector<1x12x1x4xf32>,
      %c0_80 = arith.constant 0 : index
      %c2_81 = arith.constant 2 : index
      %c1_82 = arith.constant 1 : index
      %c0_83 = arith.constant 0 : index
      %93 = vector.load %arg10[%c0_80, %c2_81, %c1_82, %c0_83] : memref<1x12x10x4xf32, #tpu.memory_space<vmem>>, vector<1x8x8x4xf32>
      tpu.vector_store %arg10[%c0_80, %c2_81, %c1_82, %c0_83], %86 {strides = array<i32>} : memref<1x12x10x4xf32, #tpu.memory_space<vmem>>, vector<1x8x8x4xf32>,
    } else {
    }
    %c0_i32_1 = arith.constant 0 : i32
    %4 = arith.addi %0, %c0_i32_1 : i32
    %c0 = arith.constant 0 : index
    %5 = arith.index_cast %4 : i32 to index
    %c0_2 = arith.constant 0 : index
    %c0_3 = arith.constant 0 : index
    %6 = vector.load %arg10[%c0, %5, %c0_2, %c0_3] : memref<1x12x10x4xf32, #tpu.memory_space<vmem>>, vector<1x6x10x4xf32>
    %7 = vector.extract_strided_slice %6 {offsets = [0, 0, 0, 0], sizes = [1, 6, 8, 4], strides = [1, 1, 1, 1]} : vector<1x6x10x4xf32> to vector<1x6x8x4xf32>
    %8 = vector.extract_strided_slice %6 {offsets = [0, 0, 1, 0], sizes = [1, 6, 8, 4], strides = [1, 1, 1, 1]} : vector<1x6x10x4xf32> to vector<1x6x8x4xf32>
    %9 = vector.extract_strided_slice %6 {offsets = [0, 0, 2, 0], sizes = [1, 6, 8, 4], strides = [1, 1, 1, 1]} : vector<1x6x10x4xf32> to vector<1x6x8x4xf32>
    %c1_i32 = arith.constant 1 : i32
    %10 = arith.addi %0, %c1_i32 : i32
    %c0_4 = arith.constant 0 : index
    %11 = arith.index_cast %10 : i32 to index
    %c0_5 = arith.constant 0 : index
    %c0_6 = arith.constant 0 : index
    %12 = vector.load %arg10[%c0_4, %11, %c0_5, %c0_6] : memref<1x12x10x4xf32, #tpu.memory_space<vmem>>, vector<1x6x10x4xf32>
    %13 = vector.extract_strided_slice %12 {offsets = [0, 0, 0, 0], sizes = [1, 6, 8, 4], strides = [1, 1, 1, 1]} : vector<1x6x10x4xf32> to vector<1x6x8x4xf32>
    %14 = vector.extract_strided_slice %12 {offsets = [0, 0, 1, 0], sizes = [1, 6, 8, 4], strides = [1, 1, 1, 1]} : vector<1x6x10x4xf32> to vector<1x6x8x4xf32>
    %15 = vector.extract_strided_slice %12 {offsets = [0, 0, 2, 0], sizes = [1, 6, 8, 4], strides = [1, 1, 1, 1]} : vector<1x6x10x4xf32> to vector<1x6x8x4xf32>
    %c2_i32 = arith.constant 2 : i32
    %16 = arith.addi %0, %c2_i32 : i32
    %c0_7 = arith.constant 0 : index
    %17 = arith.index_cast %16 : i32 to index
    %c0_8 = arith.constant 0 : index
    %c0_9 = arith.constant 0 : index
    %18 = vector.load %arg10[%c0_7, %17, %c0_8, %c0_9] : memref<1x12x10x4xf32, #tpu.memory_space<vmem>>, vector<1x6x10x4xf32>
    %19 = vector.extract_strided_slice %18 {offsets = [0, 0, 0, 0], sizes = [1, 6, 8, 4], strides = [1, 1, 1, 1]} : vector<1x6x10x4xf32> to vector<1x6x8x4xf32>
    %20 = vector.extract_strided_slice %18 {offsets = [0, 0, 1, 0], sizes = [1, 6, 8, 4], strides = [1, 1, 1, 1]} : vector<1x6x10x4xf32> to vector<1x6x8x4xf32>
    %21 = vector.extract_strided_slice %18 {offsets = [0, 0, 2, 0], sizes = [1, 6, 8, 4], strides = [1, 1, 1, 1]} : vector<1x6x10x4xf32> to vector<1x6x8x4xf32>
    %cst = arith.constant 0.000000e+00 : f32
    %22 = vector.broadcast %cst : f32 to vector<1x6x8x92xf32>
    %23 = tpu.concatenate %7, %8, %9, %13, %14, %15, %19, %20, %21, %22 in 3 : vector<1x6x8x4xf32>, vector<1x6x8x4xf32>, vector<1x6x8x4xf32>, vector<1x6x8x4xf32>, vector<1x6x8x4xf32>, vector<1x6x8x4xf32>, vector<1x6x8x4xf32>, vector<1x6x8x4xf32>, vector<1x6x8x4xf32>, vector<1x6x8x92xf32> -> vector<1x6x8x128xf32>
    %24 = vector.shape_cast %23 : vector<1x6x8x128xf32> to vector<48x128xf32>
    %25 = arith.truncf %24 : vector<48x128xf32> to vector<48x128xbf16>
    %c0_10 = arith.constant 0 : index
    %c0_11 = arith.constant 0 : index
    %26 = vector.load %arg3[%c0_10, %c0_11] : memref<128x8xbf16, #tpu.memory_space<vmem>>, vector<128x8xbf16>
    %cst_12 = arith.constant dense<0.000000e+00> : vector<48x8xf32>
    %27 = tpu.matmul %25, %26, %cst_12 {dimension_numbers = #tpu.dot_dimension_numbers<[1], [0], [0], [1], [0, 0, 1, 1], [], []>} : vector<48x128xbf16>, vector<128x8xbf16>, vector<48x8xf32> -> vector<48x8xf32>
    %c0_13 = arith.constant 0 : index
    %c0_14 = arith.constant 0 : index
    %28 = vector.load %arg4[%c0_13, %c0_14] : memref<1x8xf32, #tpu.memory_space<vmem>>, vector<1x8xf32>
    %29 = vector.broadcast %28 : vector<1x8xf32> to vector<48x8xf32>
    %30 = arith.mulf %27, %29 : vector<48x8xf32>
    %c0_15 = arith.constant 0 : index
    %c0_16 = arith.constant 0 : index
    %31 = vector.load %arg5[%c0_15, %c0_16] : memref<1x8xf32, #tpu.memory_space<vmem>>, vector<1x8xf32>
    %32 = vector.broadcast %31 : vector<1x8xf32> to vector<48x8xf32>
    %33 = arith.addf %30, %32 : vector<48x8xf32>
    %cst_17 = arith.constant 0.00999999977 : f32
    %34 = vector.broadcast %cst_17 : f32 to vector<48x8xf32>
    %35 = arith.mulf %34, %33 : vector<48x8xf32>
    %36 = arith.maximumf %33, %35 : vector<48x8xf32>
    %37 = vector.shape_cast %36 : vector<48x8xf32> to vector<1x6x8x8xf32>
    %cst_18 = arith.constant 0.000000e+00 : f32
    %38 = vector.broadcast %cst_18 : f32 to vector<1x6x1x8xf32>
    %c0_19 = arith.constant 0 : index
    %c0_20 = arith.constant 0 : index
    %c0_21 = arith.constant 0 : index
    %c0_22 = arith.constant 0 : index
    %39 = vector.load %arg11[%c0_19, %c0_20, %c0_21, %c0_22] : memref<1x6x10x8xf32, #tpu.memory_space<vmem>>, vector<1x6x1x8xf32>
    tpu.vector_store %arg11[%c0_19, %c0_20, %c0_21, %c0_22], %38 {strides = array<i32>} : memref<1x6x10x8xf32, #tpu.memory_space<vmem>>, vector<1x6x1x8xf32>,
    %c0_23 = arith.constant 0 : index
    %c0_24 = arith.constant 0 : index
    %c9 = arith.constant 9 : index
    %c0_25 = arith.constant 0 : index
    %40 = vector.load %arg11[%c0_23, %c0_24, %c9, %c0_25] : memref<1x6x10x8xf32, #tpu.memory_space<vmem>>, vector<1x6x1x8xf32>
    tpu.vector_store %arg11[%c0_23, %c0_24, %c9, %c0_25], %38 {strides = array<i32>} : memref<1x6x10x8xf32, #tpu.memory_space<vmem>>, vector<1x6x1x8xf32>,
    %c0_26 = arith.constant 0 : index
    %c0_27 = arith.constant 0 : index
    %c1 = arith.constant 1 : index
    %c0_28 = arith.constant 0 : index
    %41 = vector.load %arg11[%c0_26, %c0_27, %c1, %c0_28] : memref<1x6x10x8xf32, #tpu.memory_space<vmem>>, vector<1x6x8x8xf32>
    tpu.vector_store %arg11[%c0_26, %c0_27, %c1, %c0_28], %37 {strides = array<i32>} : memref<1x6x10x8xf32, #tpu.memory_space<vmem>>, vector<1x6x8x8xf32>,
    %cst_29 = arith.constant 0.000000e+00 : f32
    %42 = vector.broadcast %cst_29 : f32 to vector<1x1x10x8xf32>
    %c0_i32_30 = arith.constant 0 : i32
    %43 = arith.cmpi eq, %arg1, %c0_i32_30 : i32
    %44 = arith.extui %43 : i1 to i32
    %c0_i32_31 = arith.constant 0 : i32
    %45 = arith.cmpi ne, %44, %c0_i32_31 : i32
    scf.if %45 {
      %c0_58 = arith.constant 0 : index
      %c0_59 = arith.constant 0 : index
      %c0_60 = arith.constant 0 : index
      %c0_61 = arith.constant 0 : index
      %78 = vector.load %arg11[%c0_58, %c0_59, %c0_60, %c0_61] : memref<1x6x10x8xf32, #tpu.memory_space<vmem>>, vector<1x1x10x8xf32>
      tpu.vector_store %arg11[%c0_58, %c0_59, %c0_60, %c0_61], %42 {strides = array<i32>} : memref<1x6x10x8xf32, #tpu.memory_space<vmem>>, vector<1x1x10x8xf32>,
    } else {
    }
    %c1_i32_32 = arith.constant 1 : i32
    %46 = arith.cmpi eq, %arg1, %c1_i32_32 : i32
    %47 = arith.extui %46 : i1 to i32
    %c0_i32_33 = arith.constant 0 : i32
    %48 = arith.cmpi ne, %47, %c0_i32_33 : i32
    scf.if %48 {
      %c0_58 = arith.constant 0 : index
      %c5 = arith.constant 5 : index
      %c0_59 = arith.constant 0 : index
      %c0_60 = arith.constant 0 : index
      %78 = vector.load %arg11[%c0_58, %c5, %c0_59, %c0_60] : memref<1x6x10x8xf32, #tpu.memory_space<vmem>>, vector<1x1x10x8xf32>
      tpu.vector_store %arg11[%c0_58, %c5, %c0_59, %c0_60], %42 {strides = array<i32>} : memref<1x6x10x8xf32, #tpu.memory_space<vmem>>, vector<1x1x10x8xf32>,
    } else {
    }
    %c0_34 = arith.constant 0 : index
    %c0_35 = arith.constant 0 : index
    %c0_36 = arith.constant 0 : index
    %c0_37 = arith.constant 0 : index
    %49 = vector.load %arg11[%c0_34, %c0_35, %c0_36, %c0_37] : memref<1x6x10x8xf32, #tpu.memory_space<vmem>>, vector<1x4x10x8xf32>
    %50 = vector.extract_strided_slice %49 {offsets = [0, 0, 0, 0], sizes = [1, 4, 8, 8], strides = [1, 1, 1, 1]} : vector<1x4x10x8xf32> to vector<1x4x8x8xf32>
    %51 = vector.extract_strided_slice %49 {offsets = [0, 0, 1, 0], sizes = [1, 4, 8, 8], strides = [1, 1, 1, 1]} : vector<1x4x10x8xf32> to vector<1x4x8x8xf32>
    %52 = vector.extract_strided_slice %49 {offsets = [0, 0, 2, 0], sizes = [1, 4, 8, 8], strides = [1, 1, 1, 1]} : vector<1x4x10x8xf32> to vector<1x4x8x8xf32>
    %c0_38 = arith.constant 0 : index
    %c1_39 = arith.constant 1 : index
    %c0_40 = arith.constant 0 : index
    %c0_41 = arith.constant 0 : index
    %53 = vector.load %arg11[%c0_38, %c1_39, %c0_40, %c0_41] : memref<1x6x10x8xf32, #tpu.memory_space<vmem>>, vector<1x4x10x8xf32>
    %54 = vector.extract_strided_slice %53 {offsets = [0, 0, 0, 0], sizes = [1, 4, 8, 8], strides = [1, 1, 1, 1]} : vector<1x4x10x8xf32> to vector<1x4x8x8xf32>
    %55 = vector.extract_strided_slice %53 {offsets = [0, 0, 1, 0], sizes = [1, 4, 8, 8], strides = [1, 1, 1, 1]} : vector<1x4x10x8xf32> to vector<1x4x8x8xf32>
    %56 = vector.extract_strided_slice %53 {offsets = [0, 0, 2, 0], sizes = [1, 4, 8, 8], strides = [1, 1, 1, 1]} : vector<1x4x10x8xf32> to vector<1x4x8x8xf32>
    %c0_42 = arith.constant 0 : index
    %c2 = arith.constant 2 : index
    %c0_43 = arith.constant 0 : index
    %c0_44 = arith.constant 0 : index
    %57 = vector.load %arg11[%c0_42, %c2, %c0_43, %c0_44] : memref<1x6x10x8xf32, #tpu.memory_space<vmem>>, vector<1x4x10x8xf32>
    %58 = vector.extract_strided_slice %57 {offsets = [0, 0, 0, 0], sizes = [1, 4, 8, 8], strides = [1, 1, 1, 1]} : vector<1x4x10x8xf32> to vector<1x4x8x8xf32>
    %59 = vector.extract_strided_slice %57 {offsets = [0, 0, 1, 0], sizes = [1, 4, 8, 8], strides = [1, 1, 1, 1]} : vector<1x4x10x8xf32> to vector<1x4x8x8xf32>
    %60 = vector.extract_strided_slice %57 {offsets = [0, 0, 2, 0], sizes = [1, 4, 8, 8], strides = [1, 1, 1, 1]} : vector<1x4x10x8xf32> to vector<1x4x8x8xf32>
    %cst_45 = arith.constant 0.000000e+00 : f32
    %61 = vector.broadcast %cst_45 : f32 to vector<1x4x8x56xf32>
    %62 = tpu.concatenate %50, %51, %52, %54, %55, %56, %58, %59, %60, %61 in 3 : vector<1x4x8x8xf32>, vector<1x4x8x8xf32>, vector<1x4x8x8xf32>, vector<1x4x8x8xf32>, vector<1x4x8x8xf32>, vector<1x4x8x8xf32>, vector<1x4x8x8xf32>, vector<1x4x8x8xf32>, vector<1x4x8x8xf32>, vector<1x4x8x56xf32> -> vector<1x4x8x128xf32>
    %63 = vector.shape_cast %62 : vector<1x4x8x128xf32> to vector<32x128xf32>
    %64 = arith.truncf %63 : vector<32x128xf32> to vector<32x128xbf16>
    %c0_46 = arith.constant 0 : index
    %c0_47 = arith.constant 0 : index
    %65 = vector.load %arg6[%c0_46, %c0_47] : memref<128x8xbf16, #tpu.memory_space<vmem>>, vector<128x8xbf16>
    %cst_48 = arith.constant dense<0.000000e+00> : vector<32x8xf32>
    %66 = tpu.matmul %64, %65, %cst_48 {dimension_numbers = #tpu.dot_dimension_numbers<[1], [0], [0], [1], [0, 0, 1, 1], [], []>} : vector<32x128xbf16>, vector<128x8xbf16>, vector<32x8xf32> -> vector<32x8xf32>
    %c0_49 = arith.constant 0 : index
    %c0_50 = arith.constant 0 : index
    %67 = vector.load %arg7[%c0_49, %c0_50] : memref<1x8xf32, #tpu.memory_space<vmem>>, vector<1x8xf32>
    %68 = vector.broadcast %67 : vector<1x8xf32> to vector<32x8xf32>
    %69 = arith.mulf %66, %68 : vector<32x8xf32>
    %c0_51 = arith.constant 0 : index
    %c0_52 = arith.constant 0 : index
    %70 = vector.load %arg8[%c0_51, %c0_52] : memref<1x8xf32, #tpu.memory_space<vmem>>, vector<1x8xf32>
    %71 = vector.broadcast %70 : vector<1x8xf32> to vector<32x8xf32>
    %72 = arith.addf %69, %71 : vector<32x8xf32>
    %cst_53 = arith.constant 0.00999999977 : f32
    %73 = vector.broadcast %cst_53 : f32 to vector<32x8xf32>
    %74 = arith.mulf %73, %72 : vector<32x8xf32>
    %75 = arith.maximumf %72, %74 : vector<32x8xf32>
    %76 = vector.shape_cast %75 : vector<32x8xf32> to vector<1x4x8x8xf32>
    %c0_54 = arith.constant 0 : index
    %c0_55 = arith.constant 0 : index
    %c0_56 = arith.constant 0 : index
    %c0_57 = arith.constant 0 : index
    %77 = vector.load %arg9[%c0_54, %c0_55, %c0_56, %c0_57] : memref<1x4x8x8xf32, #tpu.memory_space<vmem>>, vector<1x4x8x8xf32>
    tpu.vector_store %arg9[%c0_54, %c0_55, %c0_56, %c0_57], %76 {strides = array<i32>} : memref<1x4x8x8xf32, #tpu.memory_space<vmem>>, vector<1x4x8x8xf32>,
    return
  }
  func.func @transform_0(%arg0: i32, %arg1: i32) -> (i32, i32, i32, i32, i32) {
    %c0_i32 = arith.constant 0 : i32
    %c0_i32_0 = arith.constant 0 : i32
    %c0_i32_1 = arith.constant 0 : i32
    %c0_i32_2 = arith.constant 0 : i32
    %c0_i32_3 = arith.constant 0 : i32
    return %arg0, %c0_i32, %c0_i32_0, %c0_i32_1, %c0_i32_2 : i32, i32, i32, i32, i32
  }
  func.func @transform_1(%arg0: i32, %arg1: i32) -> (i32, i32) {
    %c0_i32 = arith.constant 0 : i32
    %c0_i32_0 = arith.constant 0 : i32
    %c0_i32_1 = arith.constant 0 : i32
    return %c0_i32, %c0_i32_0 : i32, i32
  }
  func.func @transform_2(%arg0: i32, %arg1: i32) -> (i32, i32) {
    %c0_i32 = arith.constant 0 : i32
    %c0_i32_0 = arith.constant 0 : i32
    %c0_i32_1 = arith.constant 0 : i32
    return %c0_i32, %c0_i32_0 : i32, i32
  }
  func.func @transform_3(%arg0: i32, %arg1: i32) -> (i32, i32) {
    %c0_i32 = arith.constant 0 : i32
    %c0_i32_0 = arith.constant 0 : i32
    %c0_i32_1 = arith.constant 0 : i32
    return %c0_i32, %c0_i32_0 : i32, i32
  }
  func.func @transform_4(%arg0: i32, %arg1: i32) -> (i32, i32) {
    %c0_i32 = arith.constant 0 : i32
    %c0_i32_0 = arith.constant 0 : i32
    %c0_i32_1 = arith.constant 0 : i32
    return %c0_i32, %c0_i32_0 : i32, i32
  }
  func.func @transform_5(%arg0: i32, %arg1: i32) -> (i32, i32) {
    %c0_i32 = arith.constant 0 : i32
    %c0_i32_0 = arith.constant 0 : i32
    %c0_i32_1 = arith.constant 0 : i32
    return %c0_i32, %c0_i32_0 : i32, i32
  }
  func.func @transform_6(%arg0: i32, %arg1: i32) -> (i32, i32) {
    %c0_i32 = arith.constant 0 : i32
    %c0_i32_0 = arith.constant 0 : i32
    %c0_i32_1 = arith.constant 0 : i32
    return %c0_i32, %c0_i32_0 : i32, i32
  }
  func.func @transform_7(%arg0: i32, %arg1: i32) -> (i32, i32, i32, i32) {
    %c0_i32 = arith.constant 0 : i32
    %c0_i32_0 = arith.constant 0 : i32
    %c0_i32_1 = arith.constant 0 : i32
    return %arg0, %arg1, %c0_i32, %c0_i32_0 : i32, i32, i32, i32
  }
}

</mosaic_0001>

<llo_original>
// kernel: pool_conv_pallas.1
$region0: #{pool_conv_pallas.1}
  #allocation0 [shape = 'u32[]', space=smem, size = 0x4, offset = 0x4, fixed_abs, tag = 'smem constant byte address 0x4 - core index']
  #allocation1 [shape = 'u32[144,128]{1,0:T(1,128)}', space=vmem, size = 0x12000, scoped, tag = 'internal scratch']
  #allocation2 [shape = 'f32[1,12,10,4]{3,2,1,0:T(8,128)}', space=vmem, size = 0x18000, scoped, tag = 'scratch operand']
  #allocation3 [shape = 'f32[1,6,10,8]{3,2,1,0:T(8,128)}', space=vmem, size = 0xc000, scoped, tag = 'scratch operand']
  %s0 = inlined_call_operand.vmem [shape: f32[2,8,2,8,8], index: 0, kind: input, shape index: {}]
  %s1 = inlined_call_operand.vmem [shape: bf16[128,8], index: 1, kind: input, shape index: {}]
  %s2 = inlined_call_operand.vmem [shape: f32[1,8], index: 2, kind: input, shape index: {}]
  %s3 = inlined_call_operand.vmem [shape: f32[1,8], index: 3, kind: input, shape index: {}]
  %s4 = inlined_call_operand.vmem [shape: bf16[128,8], index: 4, kind: input, shape index: {}]
  %s5 = inlined_call_operand.vmem [shape: f32[1,8], index: 5, kind: input, shape index: {}]
  %s6 = inlined_call_operand.vmem [shape: f32[1,8], index: 6, kind: input, shape index: {}]
  %s7 = inlined_call_operand.vmem [shape: f32[2,8,8,8], index: 7, kind: output, shape index: {}]
  %s8 = sld [smem:[#allocation0]]
  $region73: #{pool_conv_pallas.1} parent=0
    _
  %s10 = ssub.s32 1, %s8
  %s11 = scalar_select 0, %s10, %s8
  loop: start=0, step=1, limit=6
  $region2: #{pool_conv_pallas.1} parent=0 // loop_pre_header
    _
  $region3: #{pool_conv_pallas.1} parent=0 // loop_header
    %s13 = sphi 0, %s17
    %p14 = scmp.ge.s32.totalorder %s13, 6
    %s20 = sphi 0, %s32
    %s21 = sphi 0, %s28
    %s22 = sphi 0, %s20
    %s23 = sphi 0, %s21
    %s24 = sphi 0, %s22
    %s25 = sphi 0, %s23
    %s35 = sphi 0, %s37
    %s38 = sphi 0, %s35
    %s39 = sphi 0, %s38
    %s55 = sphi 0, %s39
    %s59 = sphi 0, %s59
    %s61 = sphi 0, %s59
    %s62 = sphi 0, %s61
    %s76 = sphi 0, %s62
    %s80 = sphi 0, %s80
    %s82 = sphi 0, %s80
    %s83 = sphi 0, %s82
    %s97 = sphi 0, %s83
    %s101 = sphi 0, %s101
    %s103 = sphi 0, %s101
    %s104 = sphi 0, %s103
    %s118 = sphi 0, %s104
    %s122 = sphi 0, %s122
    %s124 = sphi 0, %s122
    %s125 = sphi 0, %s124
    %s139 = sphi 0, %s125
    %s143 = sphi 0, %s143
    %s145 = sphi 0, %s143
    %s146 = sphi 0, %s145
    %s160 = sphi 0, %s146
    %s164 = sphi 0, %s164
    %s166 = sphi 0, %s164
    %s167 = sphi 0, %s166
    %s181 = sphi 0, %s167
    %s189 = sphi 0, %s191
    %s192 = sphi 0, %s189
    %s193 = sphi 0, %s192
    %s209 = sphi 0, %s193
  $region4: #{pool_conv_pallas.1} parent=0 // loop_header_branch
    %16 = sbr.rel (%p14) target = $region8
  $region5: #{pool_conv_pallas.1} parent=0 // loop_body
    %s18 = ssub.s32 %s13, 1
    %s19 = ssub.s32 %s13, 2
    %s26 = sadd.s32 1, %s21
    %p27 = scmp.ge.s32.totalorder %s26, 2
    %s28 = scalar_select %p27, 0, %s26
    %s29 = sadd.s32 1, %s20
    %s30 = scalar_select %p27, %s29, %s20
    %p31 = scmp.ge.s32.totalorder %s30, 2
    %s32 = scalar_select %p31, 0, %s30
    %s33 = ssub.s32 %s20, %s32
    %p34 = scmp.eq.s32.totalorder %s33, 0
    %s36 = sadd.s32 %s35, 1
    %s37 = scalar_select %p34, %s35, %s36
    %p40 = pneg %p34
    %p41 = scmp.eq.s32.totalorder %s13, 3
    %p42 = por %p40, %p41
    %p43 = scmp.ne.s32.totalorder %s35, %s38
    %p44 = scmp.eq.s32.totalorder %s13, 0
    %p45 = por %p43, %p44
    %p46 = scmp.ne.s32.totalorder %s35, %s38
    %p47 = scmp.eq.s32.totalorder %s18, 3
    %p48 = por %p46, %p47
    %p49 = scmp.ne.s32.totalorder %s38, %s39
    %p50 = scmp.eq.s32.totalorder %s18, 0
    %p51 = por %p49, %p50
    %p52 = scmp.ne.s32.totalorder %s38, %s39
    %p53 = scmp.eq.s32.totalorder %s19, 3
    %p54 = por %p52, %p53
    %p56 = scmp.ne.s32.totalorder %s39, %s55
    %p57 = scmp.eq.s32.totalorder %s19, 0
    %p58 = por %p56, %p57
    %s60 = sadd.s32 %s59, 1
    %p63 = scmp.eq.s32.totalorder %s13, 3
    %p64 = scmp.ne.s32.totalorder %s59, %s61
    %p65 = scmp.eq.s32.totalorder %s13, 0
    %p66 = por %p64, %p65
    %p67 = scmp.ne.s32.totalorder %s59, %s61
    %p68 = scmp.eq.s32.totalorder %s18, 3
    %p69 = por %p67, %p68
    %p70 = scmp.ne.s32.totalorder %s61, %s62
    %p71 = scmp.eq.s32.totalorder %s18, 0
    %p72 = por %p70, %p71
    %p73 = scmp.ne.s32.totalorder %s61, %s62
    %p74 = scmp.eq.s32.totalorder %s19, 3
    %p75 = por %p73, %p74
    %p77 = scmp.ne.s32.totalorder %s62, %s76
    %p78 = scmp.eq.s32.totalorder %s19, 0
    %p79 = por %p77, %p78
    %s81 = sadd.s32 %s80, 1
    %p84 = scmp.eq.s32.totalorder %s13, 3
    %p85 = scmp.ne.s32.totalorder %s80, %s82
    %p86 = scmp.eq.s32.totalorder %s13, 0
    %p87 = por %p85, %p86
    %p88 = scmp.ne.s32.totalorder %s80, %s82
    %p89 = scmp.eq.s32.totalorder %s18, 3
    %p90 = por %p88, %p89
    %p91 = scmp.ne.s32.totalorder %s82, %s83
    %p92 = scmp.eq.s32.totalorder %s18, 0
    %p93 = por %p91, %p92
    %p94 = scmp.ne.s32.totalorder %s82, %s83
    %p95 = scmp.eq.s32.totalorder %s19, 3
    %p96 = por %p94, %p95
    %p98 = scmp.ne.s32.totalorder %s83, %s97
    %p99 = scmp.eq.s32.totalorder %s19, 0
    %p100 = por %p98, %p99
    %s102 = sadd.s32 %s101, 1
    %p105 = scmp.eq.s32.totalorder %s13, 3
    %p106 = scmp.ne.s32.totalorder %s101, %s103
    %p107 = scmp.eq.s32.totalorder %s13, 0
    %p108 = por %p106, %p107
    %p109 = scmp.ne.s32.totalorder %s101, %s103
    %p110 = scmp.eq.s32.totalorder %s18, 3
    %p111 = por %p109, %p110
    %p112 = scmp.ne.s32.totalorder %s103, %s104
    %p113 = scmp.eq.s32.totalorder %s18, 0
    %p114 = por %p112, %p113
    %p115 = scmp.ne.s32.totalorder %s103, %s104
    %p116 = scmp.eq.s32.totalorder %s19, 3
    %p117 = por %p115, %p116
    %p119 = scmp.ne.s32.totalorder %s104, %s118
    %p120 = scmp.eq.s32.totalorder %s19, 0
    %p121 = por %p119, %p120
    %s123 = sadd.s32 %s122, 1
    %p126 = scmp.eq.s32.totalorder %s13, 3
    %p127 = scmp.ne.s32.totalorder %s122, %s124
    %p128 = scmp.eq.s32.totalorder %s13, 0
    %p129 = por %p127, %p128
    %p130 = scmp.ne.s32.totalorder %s122, %s124
    %p131 = scmp.eq.s32.totalorder %s18, 3
    %p132 = por %p130, %p131
    %p133 = scmp.ne.s32.totalorder %s124, %s125
    %p134 = scmp.eq.s32.totalorder %s18, 0
    %p135 = por %p133, %p134
    %p136 = scmp.ne.s32.totalorder %s124, %s125
    %p137 = scmp.eq.s32.totalorder %s19, 3
    %p138 = por %p136, %p137
    %p140 = scmp.ne.s32.totalorder %s125, %s139
    %p141 = scmp.eq.s32.totalorder %s19, 0
    %p142 = por %p140, %p141
    %s144 = sadd.s32 %s143, 1
    %p147 = scmp.eq.s32.totalorder %s13, 3
    %p148 = scmp.ne.s32.totalorder %s143, %s145
    %p149 = scmp.eq.s32.totalorder %s13, 0
    %p150 = por %p148, %p149
    %p151 = scmp.ne.s32.totalorder %s143, %s145
    %p152 = scmp.eq.s32.totalorder %s18, 3
    %p153 = por %p151, %p152
    %p154 = scmp.ne.s32.totalorder %s145, %s146
    %p155 = scmp.eq.s32.totalorder %s18, 0
    %p156 = por %p154, %p155
    %p157 = scmp.ne.s32.totalorder %s145, %s146
    %p158 = scmp.eq.s32.totalorder %s19, 3
    %p159 = por %p157, %p158
    %p161 = scmp.ne.s32.totalorder %s146, %s160
    %p162 = scmp.eq.s32.totalorder %s19, 0
    %p163 = por %p161, %p162
    %s165 = sadd.s32 %s164, 1
    %p168 = scmp.eq.s32.totalorder %s13, 3
    %p169 = scmp.ne.s32.totalorder %s164, %s166
    %p170 = scmp.eq.s32.totalorder %s13, 0
    %p171 = por %p169, %p170
    %p172 = scmp.ne.s32.totalorder %s164, %s166
    %p173 = scmp.eq.s32.totalorder %s18, 3
    %p174 = por %p172, %p173
    %p175 = scmp.ne.s32.totalorder %s166, %s167
    %p176 = scmp.eq.s32.totalorder %s18, 0
    %p177 = por %p175, %p176
    %p178 = scmp.ne.s32.totalorder %s166, %s167
    %p179 = scmp.eq.s32.totalorder %s19, 3
    %p180 = por %p178, %p179
    %p182 = scmp.ne.s32.totalorder %s167, %s181
    %p183 = scmp.eq.s32.totalorder %s19, 0
    %p184 = por %p182, %p183
    %s185 = ssub.s32 %s20, %s32
    %s186 = ssub.s32 %s21, %s28
    %s187 = sor.u32 %s185, %s186
    %p188 = scmp.eq.s32.totalorder %s187, 0
    %s190 = sadd.s32 %s189, 1
    %s191 = scalar_select %p188, %s189, %s190
    %p194 = pneg %p188
    %p195 = scmp.eq.s32.totalorder %s13, 3
    %p196 = por %p194, %p195
    %p197 = scmp.ne.s32.totalorder %s189, %s192
    %p198 = scmp.eq.s32.totalorder %s13, 0
    %p199 = por %p197, %p198
    %p200 = scmp.ne.s32.totalorder %s189, %s192
    %p201 = scmp.eq.s32.totalorder %s18, 3
    %p202 = por %p200, %p201
    %p203 = scmp.ne.s32.totalorder %s192, %s193
    %p204 = scmp.eq.s32.totalorder %s18, 0
    %p205 = por %p203, %p204
    %p206 = scmp.ne.s32.totalorder %s192, %s193
    %p207 = scmp.eq.s32.totalorder %s19, 3
    %p208 = por %p206, %p207
    %p210 = scmp.ne.s32.totalorder %s193, %s209
    %p211 = scmp.eq.s32.totalorder %s19, 0
    %p212 = por %p210, %p211
    %p213 = scmp.le.s32.totalorder 1, %s13
    %p214 = scmp.lt.s32.totalorder %s13, 5
    %p215 = pnand %p213, %p214
    %p216 = pneg %p215
    // Predicated region
    $region9: #{pool_conv_pallas.1} parent=5 // pred_check
      _
    $region10: #{pool_conv_pallas.1} parent=5 // pred_check_branch
      %218 = sbr.rel (%p215) target = $region12
    $region11: #{pool_conv_pallas.1} parent=5 // pred_region
      %s219 = ssub.s32 %s13, 1
      // Predicated region
      $region13: #{pool_conv_pallas.1} parent=11 // pred_check
        %p220 = pneg %p72
      $region14: #{pool_conv_pallas.1} parent=11 // pred_check_branch
        %222 = sbr.rel (%p220) target = $region16
      $region15: #{pool_conv_pallas.1} parent=11 // pred_region
        _
      $region16: #{pool_conv_pallas.1} parent=11 // pred_fallthru
        _
      // Predicated region
      $region17: #{pool_conv_pallas.1} parent=11 // pred_check
        %p223 = pneg %p93
      $region18: #{pool_conv_pallas.1} parent=11 // pred_check_branch
        %225 = sbr.rel (%p223) target = $region20
      $region19: #{pool_conv_pallas.1} parent=11 // pred_region
        _
      $region20: #{pool_conv_pallas.1} parent=11 // pred_fallthru
        _
      // Predicated region
      $region21: #{pool_conv_pallas.1} parent=11 // pred_check
        %p226 = pneg %p114
      $region22: #{pool_conv_pallas.1} parent=11 // pred_check_branch
        %228 = sbr.rel (%p226) target = $region24
      $region23: #{pool_conv_pallas.1} parent=11 // pred_region
        _
      $region24: #{pool_conv_pallas.1} parent=11 // pred_fallthru
        _
      // Predicated region
      $region25: #{pool_conv_pallas.1} parent=11 // pred_check
        %p229 = pneg %p135
      $region26: #{pool_conv_pallas.1} parent=11 // pred_check_branch
        %231 = sbr.rel (%p229) target = $region28
      $region27: #{pool_conv_pallas.1} parent=11 // pred_region
        _
      $region28: #{pool_conv_pallas.1} parent=11 // pred_fallthru
        _
      // Predicated region
      $region29: #{pool_conv_pallas.1} parent=11 // pred_check
        %p232 = pneg %p156
      $region30: #{pool_conv_pallas.1} parent=11 // pred_check_branch
        %234 = sbr.rel (%p232) target = $region32
      $region31: #{pool_conv_pallas.1} parent=11 // pred_region
        _
      $region32: #{pool_conv_pallas.1} parent=11 // pred_fallthru
        _
      // Predicated region
      $region33: #{pool_conv_pallas.1} parent=11 // pred_check
        %p235 = pneg %p177
      $region34: #{pool_conv_pallas.1} parent=11 // pred_check_branch
        %237 = sbr.rel (%p235) target = $region36
      $region35: #{pool_conv_pallas.1} parent=11 // pred_region
        _
      $region36: #{pool_conv_pallas.1} parent=11 // pred_fallthru
        _
    $region12: #{pool_conv_pallas.1} parent=5 // pred_fallthru
      _
    %p238 = scmp.lt.s32.totalorder %s13, 4
    // Predicated region
    $region37: #{pool_conv_pallas.1} parent=5 // pred_check
      %p239 = pneg %p238
    $region38: #{pool_conv_pallas.1} parent=5 // pred_check_branch
      %241 = sbr.rel (%p239) target = $region40
    $region39: #{pool_conv_pallas.1} parent=5 // pred_region
      // Predicated region
      $region41: #{pool_conv_pallas.1} parent=39 // pred_check
        %p242 = pneg %p45
      $region42: #{pool_conv_pallas.1} parent=39 // pred_check_branch
        %244 = sbr.rel (%p242) target = $region44
      $region43: #{pool_conv_pallas.1} parent=39 // pred_region
        %p245 = scmp.lt.s32.totalorder %s20, 1
        %s246 = scalar_select %p245, %s20, 1
        %s247 = smul.addr %s246, 16
        %s248 = smul.addr %s247, 8
        %s249 = scalar_lea.vmem %s0, %s248
      $region44: #{pool_conv_pallas.1} parent=39 // pred_fallthru
        _
    $region40: #{pool_conv_pallas.1} parent=5 // pred_fallthru
      _
    %p250 = scmp.le.s32.totalorder 1, %s13
    %p251 = scmp.lt.s32.totalorder %s13, 5
    %p252 = pnand %p250, %p251
    %p253 = pneg %p252
    // Predicated region
    $region45: #{pool_conv_pallas.1} parent=5 // pred_check
      _
    $region46: #{pool_conv_pallas.1} parent=5 // pred_check_branch
      %255 = sbr.rel (%p252) target = $region48
    $region47: #{pool_conv_pallas.1} parent=5 // pred_region
      %s256 = ssub.s32 %s13, 1
      %p257 = scmp.lt.s32.totalorder %s22, 1
      %s258 = scalar_select %p257, %s22, 1
      %s259 = smul.addr %s258, 16
      %s260 = smul.addr %s259, 8
      %s261 = scalar_lea.vmem %s0, %s260
      %p262 = pneg %p51
      %p263 = pneg %p48
      %p264 = pneg %p72
      %p265 = pneg %p69
      %p266 = pneg %p93
      %p267 = pneg %p90
      %p268 = pneg %p114
      %p269 = pneg %p111
      %p270 = pneg %p135
      %p271 = pneg %p132
      %p272 = pneg %p156
      %p273 = pneg %p153
      %p274 = pneg %p177
      %p275 = pneg %p174
      %p276 = pneg %p205
      %p277 = pneg %p202
      %s278 = smul.u32 4, %s23
      %p279 = scmp.lt.s32.totalorder %s22, 1
      %s280 = scalar_select %p279, %s22, 1
      %p281 = scmp.lt.s32.totalorder %s278, 7
      %s282 = scalar_select %p281, %s278, 7
      %s283 = smul.addr %s280, 8
      %s284 = sadd.s32 %s282, %s283
      %s285 = smul.addr %s284, 8
      %s286 = scalar_lea.vmem %s7, %s285
      %p287 = scmp.lt.s32.totalorder %s22, 1
      %s288 = scalar_select %p287, %s22, 1
      %s289 = smul.addr %s288, 16
      %s290 = smul.addr %s289, 8
      %s291 = scalar_lea.vmem %s0, %s290
      %s292 = smul.u32 4, %s23
      %p293 = scmp.lt.s32.totalorder %s22, 1
      %s294 = scalar_select %p293, %s22, 1
      %p295 = scmp.lt.s32.totalorder %s292, 7
      %s296 = scalar_select %p295, %s292, 7
      %s297 = smul.addr %s294, 8
      %s298 = sadd.s32 %s296, %s297
      %s299 = smul.addr %s298, 8
      %s300 = scalar_lea.vmem %s7, %s299
      %s301 = smul.u32 4, %s23
      %s303 = smul.u32 %s23, 4
      %p304 = scmp.eq.s32.totalorder %s23, 0
      // Predicated region
      $region49: #{pool_conv_pallas.1} parent=47 // pred_check
        %p305 = pneg %p304
      $region50: #{pool_conv_pallas.1} parent=47 // pred_check_branch
        %307 = sbr.rel (%p305) target = $region52
      $region51: #{pool_conv_pallas.1} parent=47 // pred_region
        %v308 = vld [vmem:[%s291] sm:$0xff]
        %v309 = vld [vmem:[%s291 + $0x8] sm:$0xff]
        %v310 = vld [vmem:[%s291 + $0x10] sm:$0xff]
        %v311 = vld [vmem:[%s291 + $0x18] sm:$0xff]
        %v312 = vld [vmem:[%s291 + $0x20] sm:$0xff]
        %v313 = vld [vmem:[%s291 + $0x28] sm:$0xff]
        %v314 = vld [vmem:[%s291 + $0x30] sm:$0xff]
        %v315 = vld [vmem:[%s291 + $0x38] sm:$0xff]
        %v316 = vld [vmem:[%s291 + $0x40] sm:$0xff]
        %v317 = vld [vmem:[%s291 + $0x48] sm:$0xff]
        %v318 = vld [vmem:[%s291 + $0x50] sm:$0xff]
        %v319 = vld [vmem:[%s291 + $0x58] sm:$0xff]
        %v320 = vld [vmem:[%s291 + $0x60] sm:$0xff]
        %v321 = vld [vmem:[%s291 + $0x68] sm:$0xff]
        %v322 = vld [vmem:[%s291 + $0x70] sm:$0xff]
        %v323 = vld [vmem:[%s291 + $0x78] sm:$0xff]
        %v324 = vmax.f32 %v308, %v309
        %v325 = vmax.f32 %v310, %v311
        %v326 = vmax.f32 %v312, %v313
        %v327 = vmax.f32 %v314, %v315
        %v328 = vmax.f32 %v316, %v317
        %v329 = vmax.f32 %v318, %v319
        %v330 = vmax.f32 %v320, %v321
        %v331 = vmax.f32 %v322, %v323
        %340 = vrot.lane.b32.xlu0 %v324, 124
        %v341 = vpop.permute.xlu0 %340
        %342 = vrot.lane.b32.xlu0 %v325, 124
        %v343 = vpop.permute.xlu0 %342
        %344 = vrot.lane.b32.xlu0 %v326, 124
        %v345 = vpop.permute.xlu0 %344
        %346 = vrot.lane.b32.xlu0 %v327, 124
        %v347 = vpop.permute.xlu0 %346
        %348 = vrot.lane.b32.xlu0 %v328, 124
        %v349 = vpop.permute.xlu0 %348
        %350 = vrot.lane.b32.xlu0 %v329, 124
        %v351 = vpop.permute.xlu0 %350
        %352 = vrot.lane.b32.xlu0 %v330, 124
        %v353 = vpop.permute.xlu0 %352
        %354 = vrot.lane.b32.xlu0 %v331, 124
        %v355 = vpop.permute.xlu0 %354
        %v364 = vmax.f32 %v324, %v341
        %v365 = vmax.f32 %v325, %v343
        %v366 = vmax.f32 %v326, %v345
        %v367 = vmax.f32 %v327, %v347
        %v368 = vmax.f32 %v328, %v349
        %v369 = vmax.f32 %v329, %v351
        %v370 = vmax.f32 %v330, %v353
        %v371 = vmax.f32 %v331, %v355
        %vm372 = vcmask 31744
        %373 = vst.msk [vmem:[#allocation2] sm:$0xff] %vm372, 0.0
        %vm374 = vcmask 25600
        %375 = vst.msk [vmem:[#allocation2 + $0x8] sm:$0x3] %vm374, 0.0
        %376 = vst.msk [vmem:[#allocation2 + $0x10] sm:$0xff] %vm372, 0.0
        %377 = vst.msk [vmem:[#allocation2 + $0x18] sm:$0x3] %vm374, 0.0
        %s378 = scalar_lea.vmem [#allocation2], 160
        %379 = vst.msk [vmem:[%s378] sm:$0xff] %vm372, 0.0
        %380 = vst.msk [vmem:[%s378 + $0x8] sm:$0x3] %vm374, 0.0
        %381 = vst.msk [vmem:[%s378 + $0x10] sm:$0xff] %vm372, 0.0
        %382 = vst.msk [vmem:[%s378 + $0x18] sm:$0x3] %vm374, 0.0
        %vm383 = vcmask 24576
        %384 = vst.msk [vmem:[#allocation2] sm:$0x1] %vm383, 0.0
        %385 = vst.msk [vmem:[#allocation2 + $0x10] sm:$0x1] %vm383, 0.0
        %386 = vst.msk [vmem:[#allocation2 + $0x20] sm:$0x1] %vm383, 0.0
        %387 = vst.msk [vmem:[#allocation2 + $0x30] sm:$0x1] %vm383, 0.0
        %388 = vst.msk [vmem:[#allocation2 + $0x40] sm:$0x1] %vm383, 0.0
        %389 = vst.msk [vmem:[#allocation2 + $0x50] sm:$0x1] %vm383, 0.0
        %390 = vst.msk [vmem:[#allocation2 + $0x60] sm:$0x1] %vm383, 0.0
        %391 = vst.msk [vmem:[#allocation2 + $0x70] sm:$0x1] %vm383, 0.0
        %392 = vst.msk [vmem:[#allocation2 + $0x80] sm:$0x1] %vm383, 0.0
        %393 = vst.msk [vmem:[#allocation2 + $0x90] sm:$0x1] %vm383, 0.0
        %394 = vst.msk [vmem:[#allocation2 + $0xa0] sm:$0x1] %vm383, 0.0
        %395 = vst.msk [vmem:[#allocation2 + $0xb0] sm:$0x1] %vm383, 0.0
        %396 = vst.msk [vmem:[#allocation2 + $0x9] sm:$0x1] %vm383, 0.0
        %397 = vst.msk [vmem:[#allocation2 + $0x19] sm:$0x1] %vm383, 0.0
        %398 = vst.msk [vmem:[#allocation2 + $0x29] sm:$0x1] %vm383, 0.0
        %399 = vst.msk [vmem:[#allocation2 + $0x39] sm:$0x1] %vm383, 0.0
        %400 = vst.msk [vmem:[#allocation2 + $0x49] sm:$0x1] %vm383, 0.0
        %401 = vst.msk [vmem:[#allocation2 + $0x59] sm:$0x1] %vm383, 0.0
        %402 = vst.msk [vmem:[#allocation2 + $0x69] sm:$0x1] %vm383, 0.0
        %403 = vst.msk [vmem:[#allocation2 + $0x79] sm:$0x1] %vm383, 0.0
        %404 = vst.msk [vmem:[#allocation2 + $0x89] sm:$0x1] %vm383, 0.0
        %405 = vst.msk [vmem:[#allocation2 + $0x99] sm:$0x1] %vm383, 0.0
        %406 = vst.msk [vmem:[#allocation2 + $0xa9] sm:$0x1] %vm383, 0.0
        %407 = vst.msk [vmem:[#allocation2 + $0xb9] sm:$0x1] %vm383, 0.0
        %s408 = scalar_lea.vmem [#allocation2], 32
        %409 = vst.msk [vmem:[%s408 + $0x1] sm:$0xff] %vm372, %v364
        %410 = vst.msk [vmem:[%s408 + $0x11] sm:$0xff] %vm372, %v365
        %411 = vst.msk [vmem:[%s408 + $0x21] sm:$0xff] %vm372, %v366
        %412 = vst.msk [vmem:[%s408 + $0x31] sm:$0xff] %vm372, %v367
        %413 = vst.msk [vmem:[%s408 + $0x41] sm:$0xff] %vm372, %v368
        %414 = vst.msk [vmem:[%s408 + $0x51] sm:$0xff] %vm372, %v369
        %415 = vst.msk [vmem:[%s408 + $0x61] sm:$0xff] %vm372, %v370
        %416 = vst.msk [vmem:[%s408 + $0x71] sm:$0xff] %vm372, %v371
      $region52: #{pool_conv_pallas.1} parent=47 // pred_fallthru
        _
      %s417 = smul.u32 %s303, 16
      %s418 = scalar_lea.vmem [#allocation2], %s417
      %v419 = vld [vmem:[%s418] sm:$0xff]
      %v420 = vld [vmem:[%s418 + $0x8] sm:$0x3]
      %v421 = vld [vmem:[%s418 + $0x10] sm:$0xff]
      %v422 = vld [vmem:[%s418 + $0x18] sm:$0x3]
      %v423 = vld [vmem:[%s418 + $0x20] sm:$0xff]
      %v424 = vld [vmem:[%s418 + $0x28] sm:$0x3]
      %v425 = vld [vmem:[%s418 + $0x30] sm:$0xff]
      %v426 = vld [vmem:[%s418 + $0x38] sm:$0x3]
      %v427 = vld [vmem:[%s418 + $0x40] sm:$0xff]
      %v428 = vld [vmem:[%s418 + $0x48] sm:$0x3]
      %v429 = vld [vmem:[%s418 + $0x50] sm:$0xff]
      %v430 = vld [vmem:[%s418 + $0x58] sm:$0x3]
      %s431 = sadd.s32 %s303, 1
      %s432 = smul.u32 %s431, 16
      %s433 = scalar_lea.vmem [#allocation2], %s432
      %v434 = vld [vmem:[%s433] sm:$0xff]
      %v435 = vld [vmem:[%s433 + $0x8] sm:$0x3]
      %v436 = vld [vmem:[%s433 + $0x10] sm:$0xff]
      %v437 = vld [vmem:[%s433 + $0x18] sm:$0x3]
      %v438 = vld [vmem:[%s433 + $0x20] sm:$0xff]
      %v439 = vld [vmem:[%s433 + $0x28] sm:$0x3]
      %v440 = vld [vmem:[%s433 + $0x30] sm:$0xff]
      %v441 = vld [vmem:[%s433 + $0x38] sm:$0x3]
      %v442 = vld [vmem:[%s433 + $0x40] sm:$0xff]
      %v443 = vld [vmem:[%s433 + $0x48] sm:$0x3]
      %v444 = vld [vmem:[%s433 + $0x50] sm:$0xff]
      %v445 = vld [vmem:[%s433 + $0x58] sm:$0x3]
      %s446 = sadd.s32 %s303, 2
      %s447 = smul.u32 %s446, 16
      %s448 = scalar_lea.vmem [#allocation2], %s447
      %v449 = vld [vmem:[%s448] sm:$0xff]
      %v450 = vld [vmem:[%s448 + $0x8] sm:$0x3]
      %v451 = vld [vmem:[%s448 + $0x10] sm:$0xff]
      %v452 = vld [vmem:[%s448 + $0x18] sm:$0x3]
      %v453 = vld [vmem:[%s448 + $0x20] sm:$0xff]
      %v454 = vld [vmem:[%s448 + $0x28] sm:$0x3]
      %v455 = vld [vmem:[%s448 + $0x30] sm:$0xff]
      %v456 = vld [vmem:[%s448 + $0x38] sm:$0x3]
      %v457 = vld [vmem:[%s448 + $0x40] sm:$0xff]
      %v458 = vld [vmem:[%s448 + $0x48] sm:$0x3]
      %v459 = vld [vmem:[%s448 + $0x50] sm:$0xff]
      %v460 = vld [vmem:[%s448 + $0x58] sm:$0x3]
      %vm473 = vcmask 1046528
      %v474 = vrot.slane %v419, 1
      %v475 = vrot.slane %v420, 1
      %v476 = vsel %vm473, %v474, %v475
      %v477 = vrot.slane %v421, 1
      %v478 = vrot.slane %v422, 1
      %v479 = vsel %vm473, %v477, %v478
      %v480 = vrot.slane %v423, 1
      %v481 = vrot.slane %v424, 1
      %v482 = vsel %vm473, %v480, %v481
      %v483 = vrot.slane %v425, 1
      %v484 = vrot.slane %v426, 1
      %v485 = vsel %vm473, %v483, %v484
      %v486 = vrot.slane %v427, 1
      %v487 = vrot.slane %v428, 1
      %v488 = vsel %vm473, %v486, %v487
      %v489 = vrot.slane %v429, 1
      %v490 = vrot.slane %v430, 1
      %v491 = vsel %vm473, %v489, %v490
      %492 = vrot.lane.b32.xlu0 %v476, 4
      %v493 = vpop.permute.xlu0 %492
      %494 = vrot.lane.b32.xlu0 %v479, 4
      %v495 = vpop.permute.xlu0 %494
      %496 = vrot.lane.b32.xlu0 %v482, 4
      %v497 = vpop.permute.xlu0 %496
      %498 = vrot.lane.b32.xlu0 %v485, 4
      %v499 = vpop.permute.xlu0 %498
      %500 = vrot.lane.b32.xlu0 %v488, 4
      %v501 = vpop.permute.xlu0 %500
      %502 = vrot.lane.b32.xlu0 %v491, 4
      %v503 = vpop.permute.xlu0 %502
      %vm510 = vcmask 1045504
      %v511 = vrot.slane %v419, 2
      %v512 = vrot.slane %v420, 2
      %v513 = vsel %vm510, %v511, %v512
      %v514 = vrot.slane %v421, 2
      %v515 = vrot.slane %v422, 2
      %v516 = vsel %vm510, %v514, %v515
      %v517 = vrot.slane %v423, 2
      %v518 = vrot.slane %v424, 2
      %v519 = vsel %vm510, %v517, %v518
      %v520 = vrot.slane %v425, 2
      %v521 = vrot.slane %v426, 2
      %v522 = vsel %vm510, %v520, %v521
      %v523 = vrot.slane %v427, 2
      %v524 = vrot.slane %v428, 2
      %v525 = vsel %vm510, %v523, %v524
      %v526 = vrot.slane %v429, 2
      %v527 = vrot.slane %v430, 2
      %v528 = vsel %vm510, %v526, %v527
      %529 = vrot.lane.b32.xlu0 %v513, 8
      %v530 = vpop.permute.xlu0 %529
      %531 = vrot.lane.b32.xlu0 %v516, 8
      %v532 = vpop.permute.xlu0 %531
      %533 = vrot.lane.b32.xlu0 %v519, 8
      %v534 = vpop.permute.xlu0 %533
      %535 = vrot.lane.b32.xlu0 %v522, 8
      %v536 = vpop.permute.xlu0 %535
      %537 = vrot.lane.b32.xlu0 %v525, 8
      %v538 = vpop.permute.xlu0 %537
      %539 = vrot.lane.b32.xlu0 %v528, 8
      %v540 = vpop.permute.xlu0 %539
      %553 = vrot.lane.b32.xlu0 %v434, 12
      %v554 = vpop.permute.xlu0 %553
      %555 = vrot.lane.b32.xlu0 %v436, 12
      %v556 = vpop.permute.xlu0 %555
      %557 = vrot.lane.b32.xlu0 %v438, 12
      %v558 = vpop.permute.xlu0 %557
      %559 = vrot.lane.b32.xlu0 %v440, 12
      %v560 = vpop.permute.xlu0 %559
      %561 = vrot.lane.b32.xlu0 %v442, 12
      %v562 = vpop.permute.xlu0 %561
      %563 = vrot.lane.b32.xlu0 %v444, 12
      %v564 = vpop.permute.xlu0 %563
      %v577 = vrot.slane %v434, 1
      %v578 = vrot.slane %v435, 1
      %v579 = vsel %vm473, %v577, %v578
      %v580 = vrot.slane %v436, 1
      %v581 = vrot.slane %v437, 1
      %v582 = vsel %vm473, %v580, %v581
      %v583 = vrot.slane %v438, 1
      %v584 = vrot.slane %v439, 1
      %v585 = vsel %vm473, %v583, %v584
      %v586 = vrot.slane %v440, 1
      %v587 = vrot.slane %v441, 1
      %v588 = vsel %vm473, %v586, %v587
      %v589 = vrot.slane %v442, 1
      %v590 = vrot.slane %v443, 1
      %v591 = vsel %vm473, %v589, %v590
      %v592 = vrot.slane %v444, 1
      %v593 = vrot.slane %v445, 1
      %v594 = vsel %vm473, %v592, %v593
      %595 = vrot.lane.b32.xlu0 %v579, 16
      %v596 = vpop.permute.xlu0 %595
      %597 = vrot.lane.b32.xlu0 %v582, 16
      %v598 = vpop.permute.xlu0 %597
      %599 = vrot.lane.b32.xlu0 %v585, 16
      %v600 = vpop.permute.xlu0 %599
      %601 = vrot.lane.b32.xlu0 %v588, 16
      %v602 = vpop.permute.xlu0 %601
      %603 = vrot.lane.b32.xlu0 %v591, 16
      %v604 = vpop.permute.xlu0 %603
      %605 = vrot.lane.b32.xlu0 %v594, 16
      %v606 = vpop.permute.xlu0 %605
      %v613 = vrot.slane %v434, 2
      %v614 = vrot.slane %v435, 2
      %v615 = vsel %vm510, %v613, %v614
      %v616 = vrot.slane %v436, 2
      %v617 = vrot.slane %v437, 2
      %v618 = vsel %vm510, %v616, %v617
      %v619 = vrot.slane %v438, 2
      %v620 = vrot.slane %v439, 2
      %v621 = vsel %vm510, %v619, %v620
      %v622 = vrot.slane %v440, 2
      %v623 = vrot.slane %v441, 2
      %v624 = vsel %vm510, %v622, %v623
      %v625 = vrot.slane %v442, 2
      %v626 = vrot.slane %v443, 2
      %v627 = vsel %vm510, %v625, %v626
      %v628 = vrot.slane %v444, 2
      %v629 = vrot.slane %v445, 2
      %v630 = vsel %vm510, %v628, %v629
      %631 = vrot.lane.b32.xlu0 %v615, 20
      %v632 = vpop.permute.xlu0 %631
      %633 = vrot.lane.b32.xlu0 %v618, 20
      %v634 = vpop.permute.xlu0 %633
      %635 = vrot.lane.b32.xlu0 %v621, 20
      %v636 = vpop.permute.xlu0 %635
      %637 = vrot.lane.b32.xlu0 %v624, 20
      %v638 = vpop.permute.xlu0 %637
      %639 = vrot.lane.b32.xlu0 %v627, 20
      %v640 = vpop.permute.xlu0 %639
      %641 = vrot.lane.b32.xlu0 %v630, 20
      %v642 = vpop.permute.xlu0 %641
      %655 = vrot.lane.b32.xlu0 %v449, 24
      %v656 = vpop.permute.xlu0 %655
      %657 = vrot.lane.b32.xlu0 %v451, 24
      %v658 = vpop.permute.xlu0 %657
      %659 = vrot.lane.b32.xlu0 %v453, 24
      %v660 = vpop.permute.xlu0 %659
      %661 = vrot.lane.b32.xlu0 %v455, 24
      %v662 = vpop.permute.xlu0 %661
      %663 = vrot.lane.b32.xlu0 %v457, 24
      %v664 = vpop.permute.xlu0 %663
      %665 = vrot.lane.b32.xlu0 %v459, 24
      %v666 = vpop.permute.xlu0 %665
      %v679 = vrot.slane %v449, 1
      %v680 = vrot.slane %v450, 1
      %v681 = vsel %vm473, %v679, %v680
      %v682 = vrot.slane %v451, 1
      %v683 = vrot.slane %v452, 1
      %v684 = vsel %vm473, %v682, %v683
      %v685 = vrot.slane %v453, 1
      %v686 = vrot.slane %v454, 1
      %v687 = vsel %vm473, %v685, %v686
      %v688 = vrot.slane %v455, 1
      %v689 = vrot.slane %v456, 1
      %v690 = vsel %vm473, %v688, %v689
      %v691 = vrot.slane %v457, 1
      %v692 = vrot.slane %v458, 1
      %v693 = vsel %vm473, %v691, %v692
      %v694 = vrot.slane %v459, 1
      %v695 = vrot.slane %v460, 1
      %v696 = vsel %vm473, %v694, %v695
      %697 = vrot.lane.b32.xlu0 %v681, 28
      %v698 = vpop.permute.xlu0 %697
      %699 = vrot.lane.b32.xlu0 %v684, 28
      %v700 = vpop.permute.xlu0 %699
      %701 = vrot.lane.b32.xlu0 %v687, 28
      %v702 = vpop.permute.xlu0 %701
      %703 = vrot.lane.b32.xlu0 %v690, 28
      %v704 = vpop.permute.xlu0 %703
      %705 = vrot.lane.b32.xlu0 %v693, 28
      %v706 = vpop.permute.xlu0 %705
      %707 = vrot.lane.b32.xlu0 %v696, 28
      %v708 = vpop.permute.xlu0 %707
      %v715 = vrot.slane %v449, 2
      %v716 = vrot.slane %v450, 2
      %v717 = vsel %vm510, %v715, %v716
      %v718 = vrot.slane %v451, 2
      %v719 = vrot.slane %v452, 2
      %v720 = vsel %vm510, %v718, %v719
      %v721 = vrot.slane %v453, 2
      %v722 = vrot.slane %v454, 2
      %v723 = vsel %vm510, %v721, %v722
      %v724 = vrot.slane %v455, 2
      %v725 = vrot.slane %v456, 2
      %v726 = vsel %vm510, %v724, %v725
      %v727 = vrot.slane %v457, 2
      %v728 = vrot.slane %v458, 2
      %v729 = vsel %vm510, %v727, %v728
      %v730 = vrot.slane %v459, 2
      %v731 = vrot.slane %v460, 2
      %v732 = vsel %vm510, %v730, %v731
      %733 = vrot.lane.b32.xlu0 %v717, 32
      %v734 = vpop.permute.xlu0 %733
      %735 = vrot.lane.b32.xlu0 %v720, 32
      %v736 = vpop.permute.xlu0 %735
      %737 = vrot.lane.b32.xlu0 %v723, 32
      %v738 = vpop.permute.xlu0 %737
      %739 = vrot.lane.b32.xlu0 %v726, 32
      %v740 = vpop.permute.xlu0 %739
      %741 = vrot.lane.b32.xlu0 %v729, 32
      %v742 = vpop.permute.xlu0 %741
      %743 = vrot.lane.b32.xlu0 %v732, 32
      %v744 = vpop.permute.xlu0 %743
      %vm751 = vcmask 31744
      %v752 = vsel %vm751, %v419, %v493
      %v753 = vsel %vm751, %v421, %v495
      %v754 = vsel %vm751, %v423, %v497
      %v755 = vsel %vm751, %v425, %v499
      %v756 = vsel %vm751, %v427, %v501
      %v757 = vsel %vm751, %v429, %v503
      %vm758 = vcmask 64512
      %v759 = vsel %vm758, %v752, %v530
      %v760 = vsel %vm758, %v753, %v532
      %v761 = vsel %vm758, %v754, %v534
      %v762 = vsel %vm758, %v755, %v536
      %v763 = vsel %vm758, %v756, %v538
      %v764 = vsel %vm758, %v757, %v540
      %vm765 = vcmask 97280
      %v766 = vsel %vm765, %v759, %v554
      %v767 = vsel %vm765, %v760, %v556
      %v768 = vsel %vm765, %v761, %v558
      %v769 = vsel %vm765, %v762, %v560
      %v770 = vsel %vm765, %v763, %v562
      %v771 = vsel %vm765, %v764, %v564
      %vm772 = vcmask 130048
      %v773 = vsel %vm772, %v766, %v596
      %v774 = vsel %vm772, %v767, %v598
      %v775 = vsel %vm772, %v768, %v600
      %v776 = vsel %vm772, %v769, %v602
      %v777 = vsel %vm772, %v770, %v604
      %v778 = vsel %vm772, %v771, %v606
      %vm779 = vcmask 162816
      %v780 = vsel %vm779, %v773, %v632
      %v781 = vsel %vm779, %v774, %v634
      %v782 = vsel %vm779, %v775, %v636
      %v783 = vsel %vm779, %v776, %v638
      %v784 = vsel %vm779, %v777, %v640
      %v785 = vsel %vm779, %v778, %v642
      %vm786 = vcmask 195584
      %v787 = vsel %vm786, %v780, %v656
      %v788 = vsel %vm786, %v781, %v658
      %v789 = vsel %vm786, %v782, %v660
      %v790 = vsel %vm786, %v783, %v662
      %v791 = vsel %vm786, %v784, %v664
      %v792 = vsel %vm786, %v785, %v666
      %vm793 = vcmask 228352
      %v794 = vsel %vm793, %v787, %v698
      %v795 = vsel %vm793, %v788, %v700
      %v796 = vsel %vm793, %v789, %v702
      %v797 = vsel %vm793, %v790, %v704
      %v798 = vsel %vm793, %v791, %v706
      %v799 = vsel %vm793, %v792, %v708
      %vm800 = vcmask 261120
      %v801 = vsel %vm800, %v794, %v734
      %v802 = vsel %vm800, %v795, %v736
      %v803 = vsel %vm800, %v796, %v738
      %v804 = vsel %vm800, %v797, %v740
      %v805 = vsel %vm800, %v798, %v742
      %v806 = vsel %vm800, %v799, %v744
      %vm807 = vcmask 293888
      %v808 = vsel %vm807, %v801, 0.0
      %v809 = vsel %vm807, %v802, 0.0
      %v810 = vsel %vm807, %v803, 0.0
      %v811 = vsel %vm807, %v804, 0.0
      %v812 = vsel %vm807, %v805, 0.0
      %v813 = vsel %vm807, %v806, 0.0
      %v814 = vpack.c.bf16 %v809, %v808
      %v815 = vpack.c.bf16 %v811, %v810
      %v816 = vpack.c.bf16 %v813, %v812
      %v817 = vld [vmem:[%s1] sm:$0xf]
      %v818 = vld [vmem:[%s1 + $0x4] sm:$0xf]
      %v819 = vld [vmem:[%s1 + $0x8] sm:$0xf]
      %v820 = vld [vmem:[%s1 + $0xc] sm:$0xf]
      %v821 = vld [vmem:[%s1 + $0x10] sm:$0xf]
      %v822 = vld [vmem:[%s1 + $0x14] sm:$0xf]
      %v823 = vld [vmem:[%s1 + $0x18] sm:$0xf]
      %v824 = vld [vmem:[%s1 + $0x1c] sm:$0xf]
      %v825 = vld [vmem:[%s1 + $0x20] sm:$0xf]
      %v826 = vld [vmem:[%s1 + $0x24] sm:$0xf]
      %v827 = vld [vmem:[%s1 + $0x28] sm:$0xf]
      %v828 = vld [vmem:[%s1 + $0x2c] sm:$0xf]
      %v829 = vld [vmem:[%s1 + $0x30] sm:$0xf]
      %v830 = vld [vmem:[%s1 + $0x34] sm:$0xf]
      %v831 = vld [vmem:[%s1 + $0x38] sm:$0xf]
      %v832 = vld [vmem:[%s1 + $0x3c] sm:$0xf]
      %v849 = vunpack.c.l.b16 %v817
      %v850 = vunpack.c.l.b16 %v818
      %v851 = vunpack.c.l.b16 %v819
      %v852 = vunpack.c.l.b16 %v820
      %v853 = vunpack.c.l.b16 %v821
      %v854 = vunpack.c.l.b16 %v822
      %v855 = vunpack.c.l.b16 %v823
      %v856 = vunpack.c.l.b16 %v824
      %v857 = vunpack.c.l.b16 %v825
      %v858 = vunpack.c.l.b16 %v826
      %v859 = vunpack.c.l.b16 %v827
      %v860 = vunpack.c.l.b16 %v828
      %v861 = vunpack.c.l.b16 %v829
      %v862 = vunpack.c.l.b16 %v830
      %v863 = vunpack.c.l.b16 %v831
      %v864 = vunpack.c.l.b16 %v832
      %v865 = vpack.c.b16 %v850, %v849
      %v866 = vpack.c.b16 %v852, %v851
      %v867 = vpack.c.b16 %v854, %v853
      %v868 = vpack.c.b16 %v856, %v855
      %v869 = vpack.c.b16 %v858, %v857
      %v870 = vpack.c.b16 %v860, %v859
      %v871 = vpack.c.b16 %v862, %v861
      %v872 = vpack.c.b16 %v864, %v863
      %881 = vmatprep.subr.bf16.mxu0 0
      %882 = vmatpush1.bf16.msra.mxu0 %v872
      %883 = vmatprep.subr.bf16.mxu0 0
      %884 = vmatpush1.bf16.msra.mxu0 %v871
      %885 = vmatprep.subr.bf16.mxu0 0
      %886 = vmatpush1.bf16.msra.mxu0 %v870
      %887 = vmatprep.subr.bf16.mxu0 0
      %888 = vmatpush1.bf16.msra.mxu0 %v869
      %889 = vmatprep.subr.bf16.mxu0 0
      %890 = vmatpush1.bf16.msra.mxu0 %v868
      %891 = vmatprep.subr.bf16.mxu0 0
      %892 = vmatpush1.bf16.msra.mxu0 %v867
      %893 = vmatprep.subr.bf16.mxu0 0
      %894 = vmatpush1.bf16.msra.mxu0 %v866
      %895 = vmatprep.subr.bf16.mxu0 0
      %896 = vmatpush1.bf16.msra.mxu0 %v865
      %897 = vmatprep.subr.bf16.mxu0 0
      %898 = vmatpush2.bf16.msra.mxu0 0
      %899 = vmatprep.subr.bf16.mxu0 0
      %900 = vmatpush2.bf16.msra.mxu0 0
      %901 = vmatprep.subr.bf16.mxu0 0
      %902 = vmatpush2.bf16.msra.mxu0 0
      %903 = vmatprep.subr.bf16.mxu0 0
      %904 = vmatpush2.bf16.msra.mxu0 0
      %905 = vmatprep.subr.bf16.mxu0 0
      %906 = vmatpush2.bf16.msra.mxu0 0
      %907 = vmatprep.subr.bf16.mxu0 0
      %908 = vmatpush2.bf16.msra.mxu0 0
      %909 = vmatprep.subr.bf16.mxu0 0
      %910 = vmatpush2.bf16.msra.mxu0 0
      %911 = vmatprep.subr.bf16.mxu0 0
      %912 = vmatpush2.bf16.msra.mxu0 0
      %913 = vmatprep.mubr.bf16.mxu0 0
      %914 = vmatmul.mubr.bf16.gmra.mxu0 %v814
      %v915 = vpop.f32.mrf.mxu0
      %v916 = vadd.f32 0.0, %v915
      %v917 = vpop.f32.mrf.mxu0
      %v918 = vpop.f32.mrf.mxu0
      %v919 = vadd.f32 0.0, %v918
      %v920 = vpop.f32.mrf.mxu0
      %921 = vmatprep.mubr.bf16.mxu0 0
      %922 = vmatmul.mubr.bf16.gmra.mxu0 %v815
      %v923 = vpop.f32.mrf.mxu0
      %v924 = vadd.f32 0.0, %v923
      %v925 = vpop.f32.mrf.mxu0
      %v926 = vpop.f32.mrf.mxu0
      %v927 = vadd.f32 0.0, %v926
      %v928 = vpop.f32.mrf.mxu0
      %929 = vmatprep.mubr.bf16.mxu0 0
      %930 = vmatmul.mubr.bf16.gmra.mxu0 %v816
      %v931 = vpop.f32.mrf.mxu0
      %v932 = vadd.f32 0.0, %v931
      %v933 = vpop.f32.mrf.mxu0
      %v934 = vpop.f32.mrf.mxu0
      %v935 = vadd.f32 0.0, %v934
      %v936 = vpop.f32.mrf.mxu0
      %937 = vdwg.mxu0
      %v938 = vld [vmem:[%s2] sm:$0x1]
      %v940 = vlaneseq
      %v941 = vshrl.u32 %v940, 7
      %v942 = vsub.s32 0, %v941
      %v943 = vrot.slane %v938, %v942
      %v945 = vmul.f32 %v916, %v943
      %v946 = vmul.f32 %v919, %v943
      %v947 = vmul.f32 %v924, %v943
      %v948 = vmul.f32 %v927, %v943
      %v949 = vmul.f32 %v932, %v943
      %v950 = vmul.f32 %v935, %v943
      %v951 = vld [vmem:[%s3] sm:$0x1]
      %v953 = vlaneseq
      %v954 = vshrl.u32 %v953, 7
      %v955 = vsub.s32 0, %v954
      %v956 = vrot.slane %v951, %v955
      %v958 = vadd.f32 %v945, %v956
      %v959 = vadd.f32 %v946, %v956
      %v960 = vadd.f32 %v947, %v956
      %v961 = vadd.f32 %v948, %v956
      %v962 = vadd.f32 %v949, %v956
      %v963 = vadd.f32 %v950, %v956
      %v964 = vmul.f32 %v958, 0.01
      %v965 = vmul.f32 %v959, 0.01
      %v966 = vmul.f32 %v960, 0.01
      %v967 = vmul.f32 %v961, 0.01
      %v968 = vmul.f32 %v962, 0.01
      %v969 = vmul.f32 %v963, 0.01
      %v970 = vmax.f32 %v958, %v964
      %v971 = vmax.f32 %v959, %v965
      %v972 = vmax.f32 %v960, %v966
      %v973 = vmax.f32 %v961, %v967
      %v974 = vmax.f32 %v962, %v968
      %v975 = vmax.f32 %v963, %v969
      %vm976 = vcmask 57344
      %977 = vst.msk [vmem:[#allocation3] sm:$0x1] %vm976, 0.0
      %978 = vst.msk [vmem:[#allocation3 + $0x10] sm:$0x1] %vm976, 0.0
      %979 = vst.msk [vmem:[#allocation3 + $0x20] sm:$0x1] %vm976, 0.0
      %980 = vst.msk [vmem:[#allocation3 + $0x30] sm:$0x1] %vm976, 0.0
      %981 = vst.msk [vmem:[#allocation3 + $0x40] sm:$0x1] %vm976, 0.0
      %982 = vst.msk [vmem:[#allocation3 + $0x50] sm:$0x1] %vm976, 0.0
      %983 = vst.msk [vmem:[#allocation3 + $0x9] sm:$0x1] %vm976, 0.0
      %984 = vst.msk [vmem:[#allocation3 + $0x19] sm:$0x1] %vm976, 0.0
      %985 = vst.msk [vmem:[#allocation3 + $0x29] sm:$0x1] %vm976, 0.0
      %986 = vst.msk [vmem:[#allocation3 + $0x39] sm:$0x1] %vm976, 0.0
      %987 = vst.msk [vmem:[#allocation3 + $0x49] sm:$0x1] %vm976, 0.0
      %988 = vst.msk [vmem:[#allocation3 + $0x59] sm:$0x1] %vm976, 0.0
      %989 = vst.msk [vmem:[#allocation3 + $0x1] sm:$0xff] %vm758, %v970
      %990 = vst.msk [vmem:[#allocation3 + $0x11] sm:$0xff] %vm758, %v971
      %991 = vst.msk [vmem:[#allocation3 + $0x21] sm:$0xff] %vm758, %v972
      %992 = vst.msk [vmem:[#allocation3 + $0x31] sm:$0xff] %vm758, %v973
      %993 = vst.msk [vmem:[#allocation3 + $0x41] sm:$0xff] %vm758, %v974
      %994 = vst.msk [vmem:[#allocation3 + $0x51] sm:$0xff] %vm758, %v975
      // Predicated region
      $region53: #{pool_conv_pallas.1} parent=47 // pred_check
        %p995 = pneg %p304
      $region54: #{pool_conv_pallas.1} parent=47 // pred_check_branch
        %997 = sbr.rel (%p995) target = $region56
      $region55: #{pool_conv_pallas.1} parent=47 // pred_region
        %998 = vst.msk [vmem:[#allocation3] sm:$0xff] %vm758, 0.0
        %vm999 = vcmask 58368
        %1000 = vst.msk [vmem:[#allocation3 + $0x8] sm:$0x3] %vm999, 0.0
      $region56: #{pool_conv_pallas.1} parent=47 // pred_fallthru
        _
      %p1001 = scmp.eq.s32.totalorder %s23, 1
      // Predicated region
      $region57: #{pool_conv_pallas.1} parent=47 // pred_check
        %p1002 = pneg %p1001
      $region58: #{pool_conv_pallas.1} parent=47 // pred_check_branch
        %1004 = sbr.rel (%p1002) target = $region60
      $region59: #{pool_conv_pallas.1} parent=47 // pred_region
        %s1005 = scalar_lea.vmem [#allocation3], 80
        %1006 = vst.msk [vmem:[%s1005] sm:$0xff] %vm758, 0.0
        %vm1007 = vcmask 58368
        %1008 = vst.msk [vmem:[%s1005 + $0x8] sm:$0x3] %vm1007, 0.0
      $region60: #{pool_conv_pallas.1} parent=47 // pred_fallthru
        _
      %v1009 = vld [vmem:[#allocation3] sm:$0xff]
      %v1010 = vld [vmem:[#allocation3 + $0x8] sm:$0x3]
      %v1011 = vld [vmem:[#allocation3 + $0x10] sm:$0xff]
      %v1012 = vld [vmem:[#allocation3 + $0x18] sm:$0x3]
      %v1013 = vld [vmem:[#allocation3 + $0x20] sm:$0xff]
      %v1014 = vld [vmem:[#allocation3 + $0x28] sm:$0x3]
      %v1015 = vld [vmem:[#allocation3 + $0x30] sm:$0xff]
      %v1016 = vld [vmem:[#allocation3 + $0x38] sm:$0x3]
      %s1017 = scalar_lea.vmem [#allocation3], 16
      %v1018 = vld [vmem:[%s1017] sm:$0xff]
      %v1019 = vld [vmem:[%s1017 + $0x8] sm:$0x3]
      %v1020 = vld [vmem:[%s1017 + $0x10] sm:$0xff]
      %v1021 = vld [vmem:[%s1017 + $0x18] sm:$0x3]
      %v1022 = vld [vmem:[%s1017 + $0x20] sm:$0xff]
      %v1023 = vld [vmem:[%s1017 + $0x28] sm:$0x3]
      %v1024 = vld [vmem:[%s1017 + $0x30] sm:$0xff]
      %v1025 = vld [vmem:[%s1017 + $0x38] sm:$0x3]
      %s1026 = scalar_lea.vmem [#allocation3], 32
      %v1027 = vld [vmem:[%s1026] sm:$0xff]
      %v1028 = vld [vmem:[%s1026 + $0x8] sm:$0x3]
      %v1029 = vld [vmem:[%s1026 + $0x10] sm:$0xff]
      %v1030 = vld [vmem:[%s1026 + $0x18] sm:$0x3]
      %v1031 = vld [vmem:[%s1026 + $0x20] sm:$0xff]
      %v1032 = vld [vmem:[%s1026 + $0x28] sm:$0x3]
      %v1033 = vld [vmem:[%s1026 + $0x30] sm:$0xff]
      %v1034 = vld [vmem:[%s1026 + $0x38] sm:$0x3]
      %v1043 = vrot.slane %v1009, 1
      %v1044 = vrot.slane %v1010, 1
      %v1045 = vsel %vm473, %v1043, %v1044
      %v1046 = vrot.slane %v1011, 1
      %v1047 = vrot.slane %v1012, 1
      %v1048 = vsel %vm473, %v1046, %v1047
      %v1049 = vrot.slane %v1013, 1
      %v1050 = vrot.slane %v1014, 1
      %v1051 = vsel %vm473, %v1049, %v1050
      %v1052 = vrot.slane %v1015, 1
      %v1053 = vrot.slane %v1016, 1
      %v1054 = vsel %vm473, %v1052, %v1053
      %1055 = vrot.lane.b32.xlu0 %v1045, 8
      %v1056 = vpop.permute.xlu0 %1055
      %1057 = vrot.lane.b32.xlu0 %v1048, 8
      %v1058 = vpop.permute.xlu0 %1057
      %1059 = vrot.lane.b32.xlu0 %v1051, 8
      %v1060 = vpop.permute.xlu0 %1059
      %1061 = vrot.lane.b32.xlu0 %v1054, 8
      %v1062 = vpop.permute.xlu0 %1061
      %v1067 = vrot.slane %v1009, 2
      %v1068 = vrot.slane %v1010, 2
      %v1069 = vsel %vm510, %v1067, %v1068
      %v1070 = vrot.slane %v1011, 2
      %v1071 = vrot.slane %v1012, 2
      %v1072 = vsel %vm510, %v1070, %v1071
      %v1073 = vrot.slane %v1013, 2
      %v1074 = vrot.slane %v1014, 2
      %v1075 = vsel %vm510, %v1073, %v1074
      %v1076 = vrot.slane %v1015, 2
      %v1077 = vrot.slane %v1016, 2
      %v1078 = vsel %vm510, %v1076, %v1077
      %1079 = vrot.lane.b32.xlu0 %v1069, 16
      %v1080 = vpop.permute.xlu0 %1079
      %1081 = vrot.lane.b32.xlu0 %v1072, 16
      %v1082 = vpop.permute.xlu0 %1081
      %1083 = vrot.lane.b32.xlu0 %v1075, 16
      %v1084 = vpop.permute.xlu0 %1083
      %1085 = vrot.lane.b32.xlu0 %v1078, 16
      %v1086 = vpop.permute.xlu0 %1085
      %1095 = vrot.lane.b32.xlu0 %v1018, 24
      %v1096 = vpop.permute.xlu0 %1095
      %1097 = vrot.lane.b32.xlu0 %v1020, 24
      %v1098 = vpop.permute.xlu0 %1097
      %1099 = vrot.lane.b32.xlu0 %v1022, 24
      %v1100 = vpop.permute.xlu0 %1099
      %1101 = vrot.lane.b32.xlu0 %v1024, 24
      %v1102 = vpop.permute.xlu0 %1101
      %v1111 = vrot.slane %v1018, 1
      %v1112 = vrot.slane %v1019, 1
      %v1113 = vsel %vm473, %v1111, %v1112
      %v1114 = vrot.slane %v1020, 1
      %v1115 = vrot.slane %v1021, 1
      %v1116 = vsel %vm473, %v1114, %v1115
      %v1117 = vrot.slane %v1022, 1
      %v1118 = vrot.slane %v1023, 1
      %v1119 = vsel %vm473, %v1117, %v1118
      %v1120 = vrot.slane %v1024, 1
      %v1121 = vrot.slane %v1025, 1
      %v1122 = vsel %vm473, %v1120, %v1121
      %1123 = vrot.lane.b32.xlu0 %v1113, 32
      %v1124 = vpop.permute.xlu0 %1123
      %1125 = vrot.lane.b32.xlu0 %v1116, 32
      %v1126 = vpop.permute.xlu0 %1125
      %1127 = vrot.lane.b32.xlu0 %v1119, 32
      %v1128 = vpop.permute.xlu0 %1127
      %1129 = vrot.lane.b32.xlu0 %v1122, 32
      %v1130 = vpop.permute.xlu0 %1129
      %v1135 = vrot.slane %v1018, 2
      %v1136 = vrot.slane %v1019, 2
      %v1137 = vsel %vm510, %v1135, %v1136
      %v1138 = vrot.slane %v1020, 2
      %v1139 = vrot.slane %v1021, 2
      %v1140 = vsel %vm510, %v1138, %v1139
      %v1141 = vrot.slane %v1022, 2
      %v1142 = vrot.slane %v1023, 2
      %v1143 = vsel %vm510, %v1141, %v1142
      %v1144 = vrot.slane %v1024, 2
      %v1145 = vrot.slane %v1025, 2
      %v1146 = vsel %vm510, %v1144, %v1145
      %1147 = vrot.lane.b32.xlu0 %v1137, 40
      %v1148 = vpop.permute.xlu0 %1147
      %1149 = vrot.lane.b32.xlu0 %v1140, 40
      %v1150 = vpop.permute.xlu0 %1149
      %1151 = vrot.lane.b32.xlu0 %v1143, 40
      %v1152 = vpop.permute.xlu0 %1151
      %1153 = vrot.lane.b32.xlu0 %v1146, 40
      %v1154 = vpop.permute.xlu0 %1153
      %1163 = vrot.lane.b32.xlu0 %v1027, 48
      %v1164 = vpop.permute.xlu0 %1163
      %1165 = vrot.lane.b32.xlu0 %v1029, 48
      %v1166 = vpop.permute.xlu0 %1165
      %1167 = vrot.lane.b32.xlu0 %v1031, 48
      %v1168 = vpop.permute.xlu0 %1167
      %1169 = vrot.lane.b32.xlu0 %v1033, 48
      %v1170 = vpop.permute.xlu0 %1169
      %v1179 = vrot.slane %v1027, 1
      %v1180 = vrot.slane %v1028, 1
      %v1181 = vsel %vm473, %v1179, %v1180
      %v1182 = vrot.slane %v1029, 1
      %v1183 = vrot.slane %v1030, 1
      %v1184 = vsel %vm473, %v1182, %v1183
      %v1185 = vrot.slane %v1031, 1
      %v1186 = vrot.slane %v1032, 1
      %v1187 = vsel %vm473, %v1185, %v1186
      %v1188 = vrot.slane %v1033, 1
      %v1189 = vrot.slane %v1034, 1
      %v1190 = vsel %vm473, %v1188, %v1189
      %1191 = vrot.lane.b32.xlu0 %v1181, 56
      %v1192 = vpop.permute.xlu0 %1191
      %1193 = vrot.lane.b32.xlu0 %v1184, 56
      %v1194 = vpop.permute.xlu0 %1193
      %1195 = vrot.lane.b32.xlu0 %v1187, 56
      %v1196 = vpop.permute.xlu0 %1195
      %1197 = vrot.lane.b32.xlu0 %v1190, 56
      %v1198 = vpop.permute.xlu0 %1197
      %v1203 = vrot.slane %v1027, 2
      %v1204 = vrot.slane %v1028, 2
      %v1205 = vsel %vm510, %v1203, %v1204
      %v1206 = vrot.slane %v1029, 2
      %v1207 = vrot.slane %v1030, 2
      %v1208 = vsel %vm510, %v1206, %v1207
      %v1209 = vrot.slane %v1031, 2
      %v1210 = vrot.slane %v1032, 2
      %v1211 = vsel %vm510, %v1209, %v1210
      %v1212 = vrot.slane %v1033, 2
      %v1213 = vrot.slane %v1034, 2
      %v1214 = vsel %vm510, %v1212, %v1213
      %1215 = vrot.lane.b32.xlu0 %v1205, 64
      %v1216 = vpop.permute.xlu0 %1215
      %1217 = vrot.lane.b32.xlu0 %v1208, 64
      %v1218 = vpop.permute.xlu0 %1217
      %1219 = vrot.lane.b32.xlu0 %v1211, 64
      %v1220 = vpop.permute.xlu0 %1219
      %1221 = vrot.lane.b32.xlu0 %v1214, 64
      %v1222 = vpop.permute.xlu0 %1221
      %v1227 = vsel %vm758, %v1009, %v1056
      %v1228 = vsel %vm758, %v1011, %v1058
      %v1229 = vsel %vm758, %v1013, %v1060
      %v1230 = vsel %vm758, %v1015, %v1062
      %v1231 = vsel %vm772, %v1227, %v1080
      %v1232 = vsel %vm772, %v1228, %v1082
      %v1233 = vsel %vm772, %v1229, %v1084
      %v1234 = vsel %vm772, %v1230, %v1086
      %v1235 = vsel %vm786, %v1231, %v1096
      %v1236 = vsel %vm786, %v1232, %v1098
      %v1237 = vsel %vm786, %v1233, %v1100
      %v1238 = vsel %vm786, %v1234, %v1102
      %v1239 = vsel %vm800, %v1235, %v1124
      %v1240 = vsel %vm800, %v1236, %v1126
      %v1241 = vsel %vm800, %v1237, %v1128
      %v1242 = vsel %vm800, %v1238, %v1130
      %vm1243 = vcmask 326656
      %v1244 = vsel %vm1243, %v1239, %v1148
      %v1245 = vsel %vm1243, %v1240, %v1150
      %v1246 = vsel %vm1243, %v1241, %v1152
      %v1247 = vsel %vm1243, %v1242, %v1154
      %vm1248 = vcmask 392192
      %v1249 = vsel %vm1248, %v1244, %v1164
      %v1250 = vsel %vm1248, %v1245, %v1166
      %v1251 = vsel %vm1248, %v1246, %v1168
      %v1252 = vsel %vm1248, %v1247, %v1170
      %vm1253 = vcmask 457728
      %v1254 = vsel %vm1253, %v1249, %v1192
      %v1255 = vsel %vm1253, %v1250, %v1194
      %v1256 = vsel %vm1253, %v1251, %v1196
      %v1257 = vsel %vm1253, %v1252, %v1198
      %vm1258 = vcmask 523264
      %v1259 = vsel %vm1258, %v1254, %v1216
      %v1260 = vsel %vm1258, %v1255, %v1218
      %v1261 = vsel %vm1258, %v1256, %v1220
      %v1262 = vsel %vm1258, %v1257, %v1222
      %vm1263 = vcmask 588800
      %v1264 = vsel %vm1263, %v1259, 0.0
      %v1265 = vsel %vm1263, %v1260, 0.0
      %v1266 = vsel %vm1263, %v1261, 0.0
      %v1267 = vsel %vm1263, %v1262, 0.0
      %v1268 = vpack.c.bf16 %v1265, %v1264
      %v1269 = vpack.c.bf16 %v1267, %v1266
      %v1270 = vld [vmem:[%s4] sm:$0xf]
      %v1271 = vld [vmem:[%s4 + $0x4] sm:$0xf]
      %v1272 = vld [vmem:[%s4 + $0x8] sm:$0xf]
      %v1273 = vld [vmem:[%s4 + $0xc] sm:$0xf]
      %v1274 = vld [vmem:[%s4 + $0x10] sm:$0xf]
      %v1275 = vld [vmem:[%s4 + $0x14] sm:$0xf]
      %v1276 = vld [vmem:[%s4 + $0x18] sm:$0xf]
      %v1277 = vld [vmem:[%s4 + $0x1c] sm:$0xf]
      %v1278 = vld [vmem:[%s4 + $0x20] sm:$0xf]
      %v1279 = vld [vmem:[%s4 + $0x24] sm:$0xf]
      %v1280 = vld [vmem:[%s4 + $0x28] sm:$0xf]
      %v1281 = vld [vmem:[%s4 + $0x2c] sm:$0xf]
      %v1282 = vld [vmem:[%s4 + $0x30] sm:$0xf]
      %v1283 = vld [vmem:[%s4 + $0x34] sm:$0xf]
      %v1284 = vld [vmem:[%s4 + $0x38] sm:$0xf]
      %v1285 = vld [vmem:[%s4 + $0x3c] sm:$0xf]
      %v1302 = vunpack.c.l.b16 %v1270
      %v1303 = vunpack.c.l.b16 %v1271
      %v1304 = vunpack.c.l.b16 %v1272
      %v1305 = vunpack.c.l.b16 %v1273
      %v1306 = vunpack.c.l.b16 %v1274
      %v1307 = vunpack.c.l.b16 %v1275
      %v1308 = vunpack.c.l.b16 %v1276
      %v1309 = vunpack.c.l.b16 %v1277
      %v1310 = vunpack.c.l.b16 %v1278
      %v1311 = vunpack.c.l.b16 %v1279
      %v1312 = vunpack.c.l.b16 %v1280
      %v1313 = vunpack.c.l.b16 %v1281
      %v1314 = vunpack.c.l.b16 %v1282
      %v1315 = vunpack.c.l.b16 %v1283
      %v1316 = vunpack.c.l.b16 %v1284
      %v1317 = vunpack.c.l.b16 %v1285
      %v1318 = vpack.c.b16 %v1303, %v1302
      %v1319 = vpack.c.b16 %v1305, %v1304
      %v1320 = vpack.c.b16 %v1307, %v1306
      %v1321 = vpack.c.b16 %v1309, %v1308
      %v1322 = vpack.c.b16 %v1311, %v1310
      %v1323 = vpack.c.b16 %v1313, %v1312
      %v1324 = vpack.c.b16 %v1315, %v1314
      %v1325 = vpack.c.b16 %v1317, %v1316
      %1334 = vmatprep.subr.bf16.mxu0 0
      %1335 = vmatpush1.bf16.msra.mxu0 %v1325
      %1336 = vmatprep.subr.bf16.mxu0 0
      %1337 = vmatpush1.bf16.msra.mxu0 %v1324
      %1338 = vmatprep.subr.bf16.mxu0 0
      %1339 = vmatpush1.bf16.msra.mxu0 %v1323
      %1340 = vmatprep.subr.bf16.mxu0 0
      %1341 = vmatpush1.bf16.msra.mxu0 %v1322
      %1342 = vmatprep.subr.bf16.mxu0 0
      %1343 = vmatpush1.bf16.msra.mxu0 %v1321
      %1344 = vmatprep.subr.bf16.mxu0 0
      %1345 = vmatpush1.bf16.msra.mxu0 %v1320
      %1346 = vmatprep.subr.bf16.mxu0 0
      %1347 = vmatpush1.bf16.msra.mxu0 %v1319
      %1348 = vmatprep.subr.bf16.mxu0 0
      %1349 = vmatpush1.bf16.msra.mxu0 %v1318
      %1350 = vmatprep.subr.bf16.mxu0 0
      %1351 = vmatpush2.bf16.msra.mxu0 0
      %1352 = vmatprep.subr.bf16.mxu0 0
      %1353 = vmatpush2.bf16.msra.mxu0 0
      %1354 = vmatprep.subr.bf16.mxu0 0
      %1355 = vmatpush2.bf16.msra.mxu0 0
      %1356 = vmatprep.subr.bf16.mxu0 0
      %1357 = vmatpush2.bf16.msra.mxu0 0
      %1358 = vmatprep.subr.bf16.mxu0 0
      %1359 = vmatpush2.bf16.msra.mxu0 0
      %1360 = vmatprep.subr.bf16.mxu0 0
      %1361 = vmatpush2.bf16.msra.mxu0 0
      %1362 = vmatprep.subr.bf16.mxu0 0
      %1363 = vmatpush2.bf16.msra.mxu0 0
      %1364 = vmatprep.subr.bf16.mxu0 0
      %1365 = vmatpush2.bf16.msra.mxu0 0
      %1366 = vmatprep.mubr.bf16.mxu0 0
      %1367 = vmatmul.mubr.bf16.gmra.mxu0 %v1268
      %v1368 = vpop.f32.mrf.mxu0
      %v1369 = vadd.f32 0.0, %v1368
      %v1370 = vpop.f32.mrf.mxu0
      %v1371 = vpop.f32.mrf.mxu0
      %v1372 = vadd.f32 0.0, %v1371
      %v1373 = vpop.f32.mrf.mxu0
      %1374 = vmatprep.mubr.bf16.mxu0 0
      %1375 = vmatmul.mubr.bf16.gmra.mxu0 %v1269
      %v1376 = vpop.f32.mrf.mxu0
      %v1377 = vadd.f32 0.0, %v1376
      %v1378 = vpop.f32.mrf.mxu0
      %v1379 = vpop.f32.mrf.mxu0
      %v1380 = vadd.f32 0.0, %v1379
      %v1381 = vpop.f32.mrf.mxu0
      %1382 = vdwg.mxu0
      %v1383 = vld [vmem:[%s5] sm:$0x1]
      %v1385 = vlaneseq
      %v1386 = vshrl.u32 %v1385, 7
      %v1387 = vsub.s32 0, %v1386
      %v1388 = vrot.slane %v1383, %v1387
      %v1390 = vmul.f32 %v1369, %v1388
      %v1391 = vmul.f32 %v1372, %v1388
      %v1392 = vmul.f32 %v1377, %v1388
      %v1393 = vmul.f32 %v1380, %v1388
      %v1394 = vld [vmem:[%s6] sm:$0x1]
      %v1396 = vlaneseq
      %v1397 = vshrl.u32 %v1396, 7
      %v1398 = vsub.s32 0, %v1397
      %v1399 = vrot.slane %v1394, %v1398
      %v1401 = vadd.f32 %v1390, %v1399
      %v1402 = vadd.f32 %v1391, %v1399
      %v1403 = vadd.f32 %v1392, %v1399
      %v1404 = vadd.f32 %v1393, %v1399
      %v1405 = vmul.f32 %v1401, 0.01
      %v1406 = vmul.f32 %v1402, 0.01
      %v1407 = vmul.f32 %v1403, 0.01
      %v1408 = vmul.f32 %v1404, 0.01
      %v1409 = vmax.f32 %v1401, %v1405
      %v1410 = vmax.f32 %v1402, %v1406
      %v1411 = vmax.f32 %v1403, %v1407
      %v1412 = vmax.f32 %v1404, %v1408
      %1413 = vst.msk [vmem:[%s300] sm:$0xff] %vm758, %v1409
      %1414 = vst.msk [vmem:[%s300 + $0x8] sm:$0xff] %vm758, %v1410
      %1415 = vst.msk [vmem:[%s300 + $0x10] sm:$0xff] %vm758, %v1411
      %1416 = vst.msk [vmem:[%s300 + $0x18] sm:$0xff] %vm758, %v1412
      %s1417 = smul.u32 4, %s23
      %p1418 = scmp.lt.s32.totalorder %s22, 1
      %s1419 = scalar_select %p1418, %s22, 1
      %p1420 = scmp.lt.s32.totalorder %s1417, 7
      %s1421 = scalar_select %p1420, %s1417, 7
      %s1422 = smul.addr %s1419, 8
      %s1423 = sadd.s32 %s1421, %s1422
      %s1424 = smul.addr %s1423, 8
      %s1425 = scalar_lea.vmem %s7, %s1424
      // Predicated region
      $region61: #{pool_conv_pallas.1} parent=47 // pred_check
        %p1426 = pneg %p202
      $region62: #{pool_conv_pallas.1} parent=47 // pred_check_branch
        %1428 = sbr.rel (%p1426) target = $region64
      $region63: #{pool_conv_pallas.1} parent=47 // pred_region
        %s1429 = smul.u32 4, %s23
      $region64: #{pool_conv_pallas.1} parent=47 // pred_fallthru
        _
    $region48: #{pool_conv_pallas.1} parent=5 // pred_fallthru
      _
    %p1430 = scmp.le.s32.totalorder 2, %s13
    // Predicated region
    $region65: #{pool_conv_pallas.1} parent=5 // pred_check
      %p1431 = pneg %p1430
    $region66: #{pool_conv_pallas.1} parent=5 // pred_check_branch
      %1433 = sbr.rel (%p1431) target = $region68
    $region67: #{pool_conv_pallas.1} parent=5 // pred_region
      %s1434 = ssub.s32 %s13, 2
      // Predicated region
      $region69: #{pool_conv_pallas.1} parent=67 // pred_check
        %p1435 = pneg %p208
      $region70: #{pool_conv_pallas.1} parent=67 // pred_check_branch
        %1437 = sbr.rel (%p1435) target = $region72
      $region71: #{pool_conv_pallas.1} parent=67 // pred_region
        %s1438 = smul.u32 4, %s25
        %p1439 = scmp.lt.s32.totalorder %s24, 1
        %s1440 = scalar_select %p1439, %s24, 1
        %p1441 = scmp.lt.s32.totalorder %s1438, 7
        %s1442 = scalar_select %p1441, %s1438, 7
        %s1443 = smul.addr %s1440, 8
        %s1444 = sadd.s32 %s1442, %s1443
        %s1445 = smul.addr %s1444, 8
        %s1446 = scalar_lea.vmem %s7, %s1445
      $region72: #{pool_conv_pallas.1} parent=67 // pred_fallthru
        _
    $region68: #{pool_conv_pallas.1} parent=5 // pred_fallthru
      _
  $region6: #{pool_conv_pallas.1} parent=0 // loop_footer
    %s17 = sadd.s32 1, %s13
  $region7: #{pool_conv_pallas.1} parent=0 // loop_footer_branch
    %12 = sbr.rel target = $region3
  $region8: #{pool_conv_pallas.1} parent=0 // loop_exit
    _

</llo_original>
